<compile_context>
chip_gen: v5e
topology: v5e:2x2
jax: 0.10.0
libtpu: 0.0.40
codegen_flags: <defaults>
</compile_context>

<pallas_src>
import math
from functools import partial

import jax
import jax.numpy as jnp
from jax.experimental import pallas as pl
from jax.experimental.pallas import tpu as pltpu


_PARAM_ORDER = ('wq', 'bq', 'wk', 'bk', 'wv', 'bv', 'wo', 'bo',
                'lnA_g', 'lnA_b', 'w1', 'b1', 'w2', 'b2', 'lnF_g', 'lnF_b')
_WEIGHT_KEYS = ('wq', 'wk', 'wv', 'wo', 'w1', 'w2')


# ------------------------------ shared math helpers ------------------------------

def _layernorm(x, gamma, beta, eps=1e-6):
    mean = jnp.mean(x, axis=-1, keepdims=True)
    var = jnp.mean(jnp.square(x - mean), axis=-1, keepdims=True)
    return (x - mean) * jax.lax.rsqrt(var + eps) * gamma + beta


def _gelu(x):
    # matches the module's custom tanh-approx gelu
    return 0.5 * x * (1.0 + jnp.tanh(math.sqrt(2.0 / math.pi) *
                                     (x + 0.044715 * x * x * x)))


# --------------------------------- Pallas kernel ---------------------------------

def fused_encoder_kernel(*refs, heads, cross, compute_dtype):
    """All TransformerEncoderLayers fused; grid = (batch_block, layer)."""
    if cross:
        (x_b_ref, x_a_ref,
         wq_ref, bq_ref, wk_ref, bk_ref, wv_ref, bv_ref, wo_ref, bo_ref,
         lnA_g_ref, lnA_b_ref, w1_ref, b1_ref, w2_ref, b2_ref,
         lnF_g_ref, lnF_b_ref,
         o_ref, act_ref, ctx_ref) = refs
    else:
        (x_b_ref,
         wq_ref, bq_ref, wk_ref, bk_ref, wv_ref, bv_ref, wo_ref, bo_ref,
         lnA_g_ref, lnA_b_ref, w1_ref, b1_ref, w2_ref, b2_ref,
         lnF_g_ref, lnF_b_ref,
         o_ref, act_ref, ctx_ref) = refs
        x_a_ref = None

    layer = pl.program_id(1)
    n_layers = pl.num_programs(1)
    nb, L, D = x_b_ref.shape
    R = nb * L
    dh = D // heads
    f32 = jnp.float32

    # Layer 0 of each batch block: load the (pos-encoded) input into the resident
    # activation scratch (persists across the layer grid axis).
    @pl.when(layer == 0)
    def _init():
        act_ref[...] = x_b_ref[...].reshape(R, D).astype(f32)

    x = act_ref[...]                                    # (R, D) residual stream, f32

    # "if iter != 0: inputs_b = layer_norm(inputs_b)"
    ln_x = _layernorm(x, lnA_g_ref[0], lnA_b_ref[0])
    gate = (layer > 0).astype(f32)
    xb = x + gate * (ln_x - x)

    if cross:
        xa = x_a_ref[...].reshape(R, D).astype(f32)     # raw (pos-encoded) inputs_a
        kv, res = xa, xa                                # key/value and residual = x_a
    else:
        kv, res = xb, xb                                # key/value and residual = x_b

    def mm(a, w_ref):                                   # bf16 MXU matmul, f32 accumulate
        return jnp.dot(a.astype(compute_dtype), w_ref[0],
                       preferred_element_type=f32)

    q = mm(xb, wq_ref) + bq_ref[0]
    k = mm(kv, wk_ref) + bk_ref[0]
    v = mm(kv, wv_ref) + bv_ref[0]
    q = q * (1.0 / math.sqrt(dh))

    q3 = q.reshape(nb, L, D)
    k3 = k.reshape(nb, L, D)
    v3 = v.reshape(nb, L, D)

    # Per-head attention, batched over the nb batch elements of this block.
    # Each head's context is stored straight into the scratch at its lane offset.
    for h in range(heads):
        sl = slice(h * dh, (h + 1) * dh)
        qh = q3[:, :, sl].astype(compute_dtype)
        kh = k3[:, :, sl].astype(compute_dtype)
        vh = v3[:, :, sl].astype(compute_dtype)
        s = jnp.einsum('bld,bmd->blm', qh, kh, preferred_element_type=f32)
        s = s - jnp.max(s, axis=-1, keepdims=True)
        e = jnp.exp(s)
        p = e * pl.reciprocal(jnp.sum(e, axis=-1, keepdims=True), approx=True)
        ctx_h = jnp.einsum('blm,bmd->bld', p.astype(compute_dtype), vh,
                           preferred_element_type=f32)
        ctx_ref[:, sl] = ctx_h.reshape(R, dh)

    attn_out = mm(ctx_ref[...], wo_ref) + bo_ref[0]
    out = attn_out + res                                # dropout(context) + residual

    # PositionwiseFeedForward: w2(gelu(w1(LN(out)))) + out
    xn = _layernorm(out, lnF_g_ref[0], lnF_b_ref[0])
    inter = _gelu(mm(xn, w1_ref) + b1_ref[0])
    ffn = mm(inter, w2_ref) + b2_ref[0]
    new_x = ffn + out

    act_ref[...] = new_x                                # carry to next layer

    @pl.when(layer == n_layers - 1)
    def _store():
        o_ref[...] = new_x.reshape(nb, L, D).astype(o_ref.dtype)


# --------------------------------- JAX wrappers ----------------------------------

def positional_encoding_table(d_model, max_len=512):
    position = jnp.arange(max_len, dtype=jnp.float32)[:, None]
    div_term = jnp.exp(jnp.arange(0, d_model, 2, dtype=jnp.float32) *
                       -(math.log(10000.0) / d_model))
    pe = jnp.zeros((max_len, d_model), dtype=jnp.float32)
    pe = pe.at[:, 0::2].set(jnp.sin(position * div_term))
    pe = pe.at[:, 1::2].set(jnp.cos(position * div_term))
    return pe


def init_layer_params(key, d_model, d_ff):
    ks = jax.random.split(key, 7)
    scale = 1.0 / math.sqrt(d_model)
    return {
        'wq': jax.random.normal(ks[0], (d_model, d_model), jnp.float32) * scale,
        'bq': jnp.zeros((1, d_model), jnp.float32),
        'wk': jax.random.normal(ks[1], (d_model, d_model), jnp.float32) * scale,
        'bk': jnp.zeros((1, d_model), jnp.float32),
        'wv': jax.random.normal(ks[2], (d_model, d_model), jnp.float32) * scale,
        'bv': jnp.zeros((1, d_model), jnp.float32),
        'wo': jax.random.normal(ks[3], (d_model, d_model), jnp.float32) * scale,
        'bo': jax.random.normal(ks[4], (1, d_model), jnp.float32) * 0.01,
        'lnA_g': jnp.ones((1, d_model), jnp.float32),
        'lnA_b': jnp.zeros((1, d_model), jnp.float32),
        'w1': jax.random.normal(ks[5], (d_model, d_ff), jnp.float32) * scale,
        'b1': jnp.zeros((1, d_ff), jnp.float32),
        'w2': jax.random.normal(ks[6], (d_ff, d_model), jnp.float32)
              * (1.0 / math.sqrt(d_ff)),
        'b2': jnp.zeros((1, d_model), jnp.float32),
        'lnF_g': jnp.ones((1, d_model), jnp.float32),
        'lnF_b': jnp.zeros((1, d_model), jnp.float32),
    }


def stack_layer_params(params_list, compute_dtype=jnp.bfloat16):
    """Stack per-layer params along a leading layer dim; weights stored in bf16."""
    stacked = {}
    for name in _PARAM_ORDER:
        arr = jnp.stack([p[name] for p in params_list], axis=0)
        if name in _WEIGHT_KEYS:
            arr = arr.astype(compute_dtype)
        stacked[name] = arr
    return stacked


def transformer_encoder(x_a, x_b, stacked_params, pe, *, heads, self_mode=None,
                        compute_dtype=jnp.bfloat16, batch_block=1):
    """Mirrors TransformerEncoder.forward (dropout = identity).

    `self_mode` is a static flag (default: identity check `x_a is x_b`) so no device
    sync is needed to dispatch between the self / cross branches.
    """
    if self_mode is None:
        self_mode = x_a is x_b
    B, L, D = x_b.shape
    assert D % heads == 0 and B % batch_block == 0
    n_layers = stacked_params['wq'].shape[0]
    nb = batch_block

    pos = pe[:L][None].astype(x_b.dtype)
    operands = [x_b + pos]
    if not self_mode:
        operands.append(x_a + pos)

    seq_spec = pl.BlockSpec((nb, L, D), lambda b, l: (b, 0, 0))

    def wspec(arr):
        nd = arr.ndim
        return pl.BlockSpec((1,) + arr.shape[1:],
                            lambda b, l, _nd=nd: (l,) + (0,) * (_nd - 1))

    param_arrays = [stacked_params[name] for name in _PARAM_ORDER]
    in_specs = [seq_spec] * len(operands) + [wspec(p) for p in param_arrays]

    kernel = partial(fused_encoder_kernel, heads=heads, cross=not self_mode,
                     compute_dtype=compute_dtype)

    return pl.pallas_call(
        kernel,
        out_shape=jax.ShapeDtypeStruct((B, L, D), x_b.dtype),
        grid=(B // nb, n_layers),
        in_specs=in_specs,
        out_specs=seq_spec,
        scratch_shapes=[pltpu.VMEM((nb * L, D), jnp.float32),   # resident activation
                        pltpu.VMEM((nb * L, D), jnp.float32)],  # attention context
        compiler_params=pltpu.CompilerParams(
            dimension_semantics=("parallel", "arbitrary")),
    )(*operands, *param_arrays)


# --------------------------- pure-JAX reference (checking) ------------------------

def reference_forward(x_a, x_b, params_list, pe, *, heads, self_mode,
                      compute_dtype=jnp.bfloat16):
    B, L, D = x_b.shape
    dh = D // heads
    cdt = compute_dtype

    def mm(a, w):
        return jnp.dot(a.astype(cdt), w.astype(cdt),
                       preferred_element_type=jnp.float32)

    pos = pe[:L][None]
    xb = x_b + pos
    xa = xb if self_mode else (x_a + pos)
    for i, p in enumerate(params_list):
        inp_b = xb if i == 0 else _layernorm(xb, p['lnA_g'], p['lnA_b'])
        kv = inp_b if self_mode else xa
        res = inp_b if self_mode else xa
        rows_q = inp_b.reshape(B * L, D)
        rows_kv = kv.reshape(B * L, D)
        q = (mm(rows_q, p['wq']) + p['bq']) * (1.0 / math.sqrt(dh))
        k = mm(rows_kv, p['wk']) + p['bk']
        v = mm(rows_kv, p['wv']) + p['bv']

        def split(t):
            return t.reshape(B, L, heads, dh).transpose(0, 2, 1, 3)

        qh, kh, vh = split(q), split(k), split(v)
        s = jnp.einsum('bhld,bhmd->bhlm', qh.astype(cdt), kh.astype(cdt),
                       preferred_element_type=jnp.float32)
        s = s - jnp.max(s, axis=-1, keepdims=True)
        e = jnp.exp(s)
        attn = e / jnp.sum(e, axis=-1, keepdims=True)
        ctx = jnp.einsum('bhlm,bhmd->bhld', attn.astype(cdt), vh.astype(cdt),
                         preferred_element_type=jnp.float32)
        ctx = ctx.transpose(0, 2, 1, 3).reshape(B * L, D)
        attn_out = mm(ctx, p['wo']) + p['bo']
        out = attn_out + res.reshape(B * L, D)
        xn = _layernorm(out, p['lnF_g'], p['lnF_b'])
        inter = _gelu(mm(xn, p['w1']) + p['b1'])
        ffn = mm(inter, p['w2']) + p['b2']
        xb = (ffn + out).reshape(B, L, D)
    return xb


# -------------------------------------- main --------------------------------------

if __name__ == "__main__":
    B, L, D = 2, 16, 128          # lane-dense model dim (multiple of 128)
    HEADS, D_FF, LAYERS = 4, 256, 2

    key = jax.random.PRNGKey(0)
    k_xb, k_xa, k_p = jax.random.split(key, 3)
    x = jax.random.normal(k_xb, (B, L, D), jnp.float32)
    x_other = jax.random.normal(k_xa, (B, L, D), jnp.float32)

    layer_keys = jax.random.split(k_p, LAYERS)
    params_list = [init_layer_params(layer_keys[i], D, D_FF) for i in range(LAYERS)]
    stacked = stack_layer_params(params_list, compute_dtype=jnp.bfloat16)
    pe = positional_encoding_table(D)

    # self-attention branch (x_a is x_b), as in TransformerEncoder.forward
    out_self = jax.block_until_ready(
        transformer_encoder(x, x, stacked, pe, heads=HEADS))
    ref_self = reference_forward(x, x, params_list, pe, heads=HEADS, self_mode=True)
    err_self = float(jnp.max(jnp.abs(out_self - ref_self)))

    # cross-attention branch (x_a != x_b): key/value = x_a, query/residual-stream = x_b
    out_cross = jax.block_until_ready(
        transformer_encoder(x_other, x, stacked, pe, heads=HEADS, self_mode=False))
    ref_cross = reference_forward(x_other, x, params_list, pe, heads=HEADS,
                                  self_mode=False)
    err_cross = float(jnp.max(jnp.abs(out_cross - ref_cross)))

    assert out_self.shape == (B, L, D) and out_cross.shape == (B, L, D)
    assert bool(jnp.all(jnp.isfinite(out_self)))
    assert bool(jnp.all(jnp.isfinite(out_cross)))
    assert err_self < 0.1 and err_cross < 0.1, (err_self, err_cross)
    print("KERNEL_OK")
</pallas_src>

<mosaic_0001>
module attributes {stable_mosaic.version = 11 : i64} {
  func.func @fused_encoder_kernel(%arg0: i32, %arg1: i32, %arg2: memref<1x16x128xf32, #tpu.memory_space<vmem>>, %arg3: memref<1x128x128xbf16, #tpu.memory_space<vmem>>, %arg4: memref<1x1x128xf32, #tpu.memory_space<vmem>>, %arg5: memref<1x128x128xbf16, #tpu.memory_space<vmem>>, %arg6: memref<1x1x128xf32, #tpu.memory_space<vmem>>, %arg7: memref<1x128x128xbf16, #tpu.memory_space<vmem>>, %arg8: memref<1x1x128xf32, #tpu.memory_space<vmem>>, %arg9: memref<1x128x128xbf16, #tpu.memory_space<vmem>>, %arg10: memref<1x1x128xf32, #tpu.memory_space<vmem>>, %arg11: memref<1x1x128xf32, #tpu.memory_space<vmem>>, %arg12: memref<1x1x128xf32, #tpu.memory_space<vmem>>, %arg13: memref<1x128x256xbf16, #tpu.memory_space<vmem>>, %arg14: memref<1x1x256xf32, #tpu.memory_space<vmem>>, %arg15: memref<1x256x128xbf16, #tpu.memory_space<vmem>>, %arg16: memref<1x1x128xf32, #tpu.memory_space<vmem>>, %arg17: memref<1x1x128xf32, #tpu.memory_space<vmem>>, %arg18: memref<1x1x128xf32, #tpu.memory_space<vmem>>, %arg19: memref<1x16x128xf32, #tpu.memory_space<vmem>>, %arg20: memref<16x128xf32, #tpu.memory_space<vmem>>, %arg21: memref<16x128xf32, #tpu.memory_space<vmem>>) attributes {dimension_semantics = [#tpu.dimension_semantics<parallel>, #tpu.dimension_semantics<arbitrary>], iteration_bounds = array<i64: 2, 2>, scalar_prefetch = 0 : i64, scratch_operands = 2 : i64, tpu.core_type = #tpu.core_type<tc>, window_params = [{transform_indices = @transform_0, window_bounds = array<i64: 1, 16, 128>}, {transform_indices = @transform_1, window_bounds = array<i64: 1, 128, 128>}, {transform_indices = @transform_2, window_bounds = array<i64: 1, 1, 128>}, {transform_indices = @transform_3, window_bounds = array<i64: 1, 128, 128>}, {transform_indices = @transform_4, window_bounds = array<i64: 1, 1, 128>}, {transform_indices = @transform_5, window_bounds = array<i64: 1, 128, 128>}, {transform_indices = @transform_6, window_bounds = array<i64: 1, 1, 128>}, {transform_indices = @transform_7, window_bounds = array<i64: 1, 128, 128>}, {transform_indices = @transform_8, window_bounds = array<i64: 1, 1, 128>}, {transform_indices = @transform_9, window_bounds = array<i64: 1, 1, 128>}, {transform_indices = @transform_10, window_bounds = array<i64: 1, 1, 128>}, {transform_indices = @transform_11, window_bounds = array<i64: 1, 128, 256>}, {transform_indices = @transform_12, window_bounds = array<i64: 1, 1, 256>}, {transform_indices = @transform_13, window_bounds = array<i64: 1, 256, 128>}, {transform_indices = @transform_14, window_bounds = array<i64: 1, 1, 128>}, {transform_indices = @transform_15, window_bounds = array<i64: 1, 1, 128>}, {transform_indices = @transform_16, window_bounds = array<i64: 1, 1, 128>}, {transform_indices = @transform_17, window_bounds = array<i64: 1, 16, 128>}]} {
    %c0_i32 = arith.constant 0 : i32
    %0 = arith.cmpi eq, %arg1, %c0_i32 : i32
    %1 = arith.extui %0 : i1 to i32
    %c0_i32_0 = arith.constant 0 : i32
    %2 = arith.cmpi ne, %1, %c0_i32_0 : i32
    scf.if %2 {
      %c0_97 = arith.constant 0 : index
      %c0_98 = arith.constant 0 : index
      %c0_99 = arith.constant 0 : index
      %220 = vector.load %arg2[%c0_97, %c0_98, %c0_99] : memref<1x16x128xf32, #tpu.memory_space<vmem>>, vector<1x16x128xf32>
      %221 = vector.shape_cast %220 : vector<1x16x128xf32> to vector<16x128xf32>
      %c0_100 = arith.constant 0 : index
      %c0_101 = arith.constant 0 : index
      %222 = vector.load %arg20[%c0_100, %c0_101] : memref<16x128xf32, #tpu.memory_space<vmem>>, vector<16x128xf32>
      tpu.vector_store %arg20[%c0_100, %c0_101], %221 {strides = array<i32>} : memref<16x128xf32, #tpu.memory_space<vmem>>, vector<16x128xf32>,
    } else {
    }
    %c0 = arith.constant 0 : index
    %c0_1 = arith.constant 0 : index
    %3 = vector.load %arg20[%c0, %c0_1] : memref<16x128xf32, #tpu.memory_space<vmem>>, vector<16x128xf32>
    %c0_2 = arith.constant 0 : index
    %c0_3 = arith.constant 0 : index
    %c0_4 = arith.constant 0 : index
    %4 = vector.load %arg11[%c0_2, %c0_3, %c0_4] : memref<1x1x128xf32, #tpu.memory_space<vmem>>, vector<1x1x128xf32>
    %5 = vector.shape_cast %4 : vector<1x1x128xf32> to vector<1x128xf32>
    %c0_5 = arith.constant 0 : index
    %c0_6 = arith.constant 0 : index
    %c0_7 = arith.constant 0 : index
    %6 = vector.load %arg12[%c0_5, %c0_6, %c0_7] : memref<1x1x128xf32, #tpu.memory_space<vmem>>, vector<1x1x128xf32>
    %7 = vector.shape_cast %6 : vector<1x1x128xf32> to vector<1x128xf32>
    %cst = arith.constant dense<0.000000e+00> : vector<16xf32>
    %8 = vector.multi_reduction <add>, %3, %cst [1] : vector<16x128xf32> to vector<16xf32>
    %9 = vector.shape_cast %8 : vector<16xf32> to vector<16x1xf32>
    %cst_8 = arith.constant 1.280000e+02 : f32
    %10 = vector.broadcast %cst_8 : f32 to vector<16x1xf32>
    %11 = arith.divf %9, %10 : vector<16x1xf32>
    %12 = vector.broadcast %11 : vector<16x1xf32> to vector<16x128xf32>
    %13 = arith.subf %3, %12 : vector<16x128xf32>
    %14 = arith.mulf %13, %13 : vector<16x128xf32>
    %cst_9 = arith.constant dense<0.000000e+00> : vector<16xf32>
    %15 = vector.multi_reduction <add>, %14, %cst_9 [1] : vector<16x128xf32> to vector<16xf32>
    %16 = vector.shape_cast %15 : vector<16xf32> to vector<16x1xf32>
    %cst_10 = arith.constant 1.280000e+02 : f32
    %17 = vector.broadcast %cst_10 : f32 to vector<16x1xf32>
    %18 = arith.divf %16, %17 : vector<16x1xf32>
    %19 = vector.broadcast %11 : vector<16x1xf32> to vector<16x128xf32>
    %20 = arith.subf %3, %19 : vector<16x128xf32>
    %cst_11 = arith.constant 9.99999997E-7 : f32
    %21 = vector.broadcast %cst_11 : f32 to vector<16x1xf32>
    %22 = arith.addf %18, %21 : vector<16x1xf32>
    %23 = math.rsqrt %22 : vector<16x1xf32>
    %24 = vector.broadcast %23 : vector<16x1xf32> to vector<16x128xf32>
    %25 = arith.mulf %20, %24 : vector<16x128xf32>
    %26 = vector.broadcast %5 : vector<1x128xf32> to vector<16x128xf32>
    %27 = arith.mulf %25, %26 : vector<16x128xf32>
    %28 = vector.broadcast %7 : vector<1x128xf32> to vector<16x128xf32>
    %29 = arith.addf %27, %28 : vector<16x128xf32>
    %c0_i32_12 = arith.constant 0 : i32
    %30 = arith.cmpi sgt, %arg1, %c0_i32_12 : i32
    %31 = arith.extui %30 : i1 to i32
    %32 = arith.sitofp %31 : i32 to f32
    %33 = arith.subf %29, %3 : vector<16x128xf32>
    %34 = vector.broadcast %32 : f32 to vector<16x128xf32>
    %35 = arith.mulf %34, %33 : vector<16x128xf32>
    %36 = arith.addf %3, %35 : vector<16x128xf32>
    %37 = arith.truncf %36 : vector<16x128xf32> to vector<16x128xbf16>
    %c0_13 = arith.constant 0 : index
    %c0_14 = arith.constant 0 : index
    %c0_15 = arith.constant 0 : index
    %38 = vector.load %arg3[%c0_13, %c0_14, %c0_15] : memref<1x128x128xbf16, #tpu.memory_space<vmem>>, vector<1x128x128xbf16>
    %39 = vector.shape_cast %38 : vector<1x128x128xbf16> to vector<128x128xbf16>
    %cst_16 = arith.constant dense<0.000000e+00> : vector<16x128xf32>
    %40 = tpu.matmul %37, %39, %cst_16 {dimension_numbers = #tpu.dot_dimension_numbers<[1], [0], [0], [1], [0, 0, 1, 1], [], []>} : vector<16x128xbf16>, vector<128x128xbf16>, vector<16x128xf32> -> vector<16x128xf32>
    %c0_17 = arith.constant 0 : index
    %c0_18 = arith.constant 0 : index
    %c0_19 = arith.constant 0 : index
    %41 = vector.load %arg4[%c0_17, %c0_18, %c0_19] : memref<1x1x128xf32, #tpu.memory_space<vmem>>, vector<1x1x128xf32>
    %42 = vector.shape_cast %41 : vector<1x1x128xf32> to vector<1x128xf32>
    %43 = vector.broadcast %42 : vector<1x128xf32> to vector<16x128xf32>
    %44 = arith.addf %40, %43 : vector<16x128xf32>
    %45 = arith.truncf %36 : vector<16x128xf32> to vector<16x128xbf16>
    %c0_20 = arith.constant 0 : index
    %c0_21 = arith.constant 0 : index
    %c0_22 = arith.constant 0 : index
    %46 = vector.load %arg5[%c0_20, %c0_21, %c0_22] : memref<1x128x128xbf16, #tpu.memory_space<vmem>>, vector<1x128x128xbf16>
    %47 = vector.shape_cast %46 : vector<1x128x128xbf16> to vector<128x128xbf16>
    %cst_23 = arith.constant dense<0.000000e+00> : vector<16x128xf32>
    %48 = tpu.matmul %45, %47, %cst_23 {dimension_numbers = #tpu.dot_dimension_numbers<[1], [0], [0], [1], [0, 0, 1, 1], [], []>} : vector<16x128xbf16>, vector<128x128xbf16>, vector<16x128xf32> -> vector<16x128xf32>
    %c0_24 = arith.constant 0 : index
    %c0_25 = arith.constant 0 : index
    %c0_26 = arith.constant 0 : index
    %49 = vector.load %arg6[%c0_24, %c0_25, %c0_26] : memref<1x1x128xf32, #tpu.memory_space<vmem>>, vector<1x1x128xf32>
    %50 = vector.shape_cast %49 : vector<1x1x128xf32> to vector<1x128xf32>
    %51 = vector.broadcast %50 : vector<1x128xf32> to vector<16x128xf32>
    %52 = arith.addf %48, %51 : vector<16x128xf32>
    %53 = arith.truncf %36 : vector<16x128xf32> to vector<16x128xbf16>
    %c0_27 = arith.constant 0 : index
    %c0_28 = arith.constant 0 : index
    %c0_29 = arith.constant 0 : index
    %54 = vector.load %arg7[%c0_27, %c0_28, %c0_29] : memref<1x128x128xbf16, #tpu.memory_space<vmem>>, vector<1x128x128xbf16>
    %55 = vector.shape_cast %54 : vector<1x128x128xbf16> to vector<128x128xbf16>
    %cst_30 = arith.constant dense<0.000000e+00> : vector<16x128xf32>
    %56 = tpu.matmul %53, %55, %cst_30 {dimension_numbers = #tpu.dot_dimension_numbers<[1], [0], [0], [1], [0, 0, 1, 1], [], []>} : vector<16x128xbf16>, vector<128x128xbf16>, vector<16x128xf32> -> vector<16x128xf32>
    %c0_31 = arith.constant 0 : index
    %c0_32 = arith.constant 0 : index
    %c0_33 = arith.constant 0 : index
    %57 = vector.load %arg8[%c0_31, %c0_32, %c0_33] : memref<1x1x128xf32, #tpu.memory_space<vmem>>, vector<1x1x128xf32>
    %58 = vector.shape_cast %57 : vector<1x1x128xf32> to vector<1x128xf32>
    %59 = vector.broadcast %58 : vector<1x128xf32> to vector<16x128xf32>
    %60 = arith.addf %56, %59 : vector<16x128xf32>
    %cst_34 = arith.constant 0.176776692 : f32
    %61 = vector.broadcast %cst_34 : f32 to vector<16x128xf32>
    %62 = arith.mulf %44, %61 : vector<16x128xf32>
    %63 = vector.shape_cast %62 : vector<16x128xf32> to vector<1x16x128xf32>
    %64 = vector.shape_cast %52 : vector<16x128xf32> to vector<1x16x128xf32>
    %65 = vector.shape_cast %60 : vector<16x128xf32> to vector<1x16x128xf32>
    %66 = vector.extract_strided_slice %63 {offsets = [0, 0, 0], sizes = [1, 16, 32], strides = [1, 1, 1]} : vector<1x16x128xf32> to vector<1x16x32xf32>
    %67 = arith.truncf %66 : vector<1x16x32xf32> to vector<1x16x32xbf16>
    %68 = vector.extract_strided_slice %64 {offsets = [0, 0, 0], sizes = [1, 16, 32], strides = [1, 1, 1]} : vector<1x16x128xf32> to vector<1x16x32xf32>
    %69 = arith.truncf %68 : vector<1x16x32xf32> to vector<1x16x32xbf16>
    %70 = vector.extract_strided_slice %65 {offsets = [0, 0, 0], sizes = [1, 16, 32], strides = [1, 1, 1]} : vector<1x16x128xf32> to vector<1x16x32xf32>
    %71 = arith.truncf %70 : vector<1x16x32xf32> to vector<1x16x32xbf16>
    "tpu.trace_start"() <{level = 10 : i32, message = "bld,bmd->blm"}> : () -> ()
    %cst_35 = arith.constant dense<0.000000e+00> : vector<1x16x16xf32>
    %72 = tpu.matmul %67, %69, %cst_35 {dimension_numbers = #tpu.dot_dimension_numbers<[2], [2], [1], [1], [0, 0, 0, 1, 1, 1], [0], [0]>} : vector<1x16x32xbf16>, vector<1x16x32xbf16>, vector<1x16x16xf32> -> vector<1x16x16xf32>
    "tpu.trace_stop"() : () -> ()
    %cst_36 = arith.constant dense<0xFF800000> : vector<1x16xf32>
    %73 = vector.multi_reduction <maximumf>, %72, %cst_36 [2] : vector<1x16x16xf32> to vector<1x16xf32>
    %74 = vector.shape_cast %73 : vector<1x16xf32> to vector<1x16x1xf32>
    %75 = vector.broadcast %74 : vector<1x16x1xf32> to vector<1x16x16xf32>
    %76 = arith.subf %72, %75 : vector<1x16x16xf32>
    %77 = math.exp %76 : vector<1x16x16xf32>
    %cst_37 = arith.constant dense<0.000000e+00> : vector<1x16xf32>
    %78 = vector.multi_reduction <add>, %77, %cst_37 [2] : vector<1x16x16xf32> to vector<1x16xf32>
    %79 = vector.shape_cast %78 : vector<1x16xf32> to vector<1x16x1xf32>
    %80 = tpu.reciprocal %79 {approx = true} : vector<1x16x1xf32> -> vector<1x16x1xf32>
    %81 = vector.broadcast %80 : vector<1x16x1xf32> to vector<1x16x16xf32>
    %82 = arith.mulf %77, %81 : vector<1x16x16xf32>
    %83 = arith.truncf %82 : vector<1x16x16xf32> to vector<1x16x16xbf16>
    "tpu.trace_start"() <{level = 10 : i32, message = "blm,bmd->bld"}> : () -> ()
    %cst_38 = arith.constant dense<0.000000e+00> : vector<1x16x32xf32>
    %84 = tpu.matmul %83, %71, %cst_38 {dimension_numbers = #tpu.dot_dimension_numbers<[2], [1], [1], [2], [0, 0, 0, 1, 1, 2], [0], [0]>} : vector<1x16x16xbf16>, vector<1x16x32xbf16>, vector<1x16x32xf32> -> vector<1x16x32xf32>
    "tpu.trace_stop"() : () -> ()
    %85 = vector.shape_cast %84 : vector<1x16x32xf32> to vector<16x32xf32>
    %c0_39 = arith.constant 0 : index
    %c0_40 = arith.constant 0 : index
    %86 = vector.load %arg21[%c0_39, %c0_40] : memref<16x128xf32, #tpu.memory_space<vmem>>, vector<16x32xf32>
    tpu.vector_store %arg21[%c0_39, %c0_40], %85 {strides = array<i32>} : memref<16x128xf32, #tpu.memory_space<vmem>>, vector<16x32xf32>,
    %87 = vector.extract_strided_slice %63 {offsets = [0, 0, 32], sizes = [1, 16, 32], strides = [1, 1, 1]} : vector<1x16x128xf32> to vector<1x16x32xf32>
    %88 = arith.truncf %87 : vector<1x16x32xf32> to vector<1x16x32xbf16>
    %89 = vector.extract_strided_slice %64 {offsets = [0, 0, 32], sizes = [1, 16, 32], strides = [1, 1, 1]} : vector<1x16x128xf32> to vector<1x16x32xf32>
    %90 = arith.truncf %89 : vector<1x16x32xf32> to vector<1x16x32xbf16>
    %91 = vector.extract_strided_slice %65 {offsets = [0, 0, 32], sizes = [1, 16, 32], strides = [1, 1, 1]} : vector<1x16x128xf32> to vector<1x16x32xf32>
    %92 = arith.truncf %91 : vector<1x16x32xf32> to vector<1x16x32xbf16>
    "tpu.trace_start"() <{level = 10 : i32, message = "bld,bmd->blm"}> : () -> ()
    %cst_41 = arith.constant dense<0.000000e+00> : vector<1x16x16xf32>
    %93 = tpu.matmul %88, %90, %cst_41 {dimension_numbers = #tpu.dot_dimension_numbers<[2], [2], [1], [1], [0, 0, 0, 1, 1, 1], [0], [0]>} : vector<1x16x32xbf16>, vector<1x16x32xbf16>, vector<1x16x16xf32> -> vector<1x16x16xf32>
    "tpu.trace_stop"() : () -> ()
    %cst_42 = arith.constant dense<0xFF800000> : vector<1x16xf32>
    %94 = vector.multi_reduction <maximumf>, %93, %cst_42 [2] : vector<1x16x16xf32> to vector<1x16xf32>
    %95 = vector.shape_cast %94 : vector<1x16xf32> to vector<1x16x1xf32>
    %96 = vector.broadcast %95 : vector<1x16x1xf32> to vector<1x16x16xf32>
    %97 = arith.subf %93, %96 : vector<1x16x16xf32>
    %98 = math.exp %97 : vector<1x16x16xf32>
    %cst_43 = arith.constant dense<0.000000e+00> : vector<1x16xf32>
    %99 = vector.multi_reduction <add>, %98, %cst_43 [2] : vector<1x16x16xf32> to vector<1x16xf32>
    %100 = vector.shape_cast %99 : vector<1x16xf32> to vector<1x16x1xf32>
    %101 = tpu.reciprocal %100 {approx = true} : vector<1x16x1xf32> -> vector<1x16x1xf32>
    %102 = vector.broadcast %101 : vector<1x16x1xf32> to vector<1x16x16xf32>
    %103 = arith.mulf %98, %102 : vector<1x16x16xf32>
    %104 = arith.truncf %103 : vector<1x16x16xf32> to vector<1x16x16xbf16>
    "tpu.trace_start"() <{level = 10 : i32, message = "blm,bmd->bld"}> : () -> ()
    %cst_44 = arith.constant dense<0.000000e+00> : vector<1x16x32xf32>
    %105 = tpu.matmul %104, %92, %cst_44 {dimension_numbers = #tpu.dot_dimension_numbers<[2], [1], [1], [2], [0, 0, 0, 1, 1, 2], [0], [0]>} : vector<1x16x16xbf16>, vector<1x16x32xbf16>, vector<1x16x32xf32> -> vector<1x16x32xf32>
    "tpu.trace_stop"() : () -> ()
    %106 = vector.shape_cast %105 : vector<1x16x32xf32> to vector<16x32xf32>
    %c0_45 = arith.constant 0 : index
    %c32 = arith.constant 32 : index
    %107 = vector.load %arg21[%c0_45, %c32] : memref<16x128xf32, #tpu.memory_space<vmem>>, vector<16x32xf32>
    tpu.vector_store %arg21[%c0_45, %c32], %106 {strides = array<i32>} : memref<16x128xf32, #tpu.memory_space<vmem>>, vector<16x32xf32>,
    %108 = vector.extract_strided_slice %63 {offsets = [0, 0, 64], sizes = [1, 16, 32], strides = [1, 1, 1]} : vector<1x16x128xf32> to vector<1x16x32xf32>
    %109 = arith.truncf %108 : vector<1x16x32xf32> to vector<1x16x32xbf16>
    %110 = vector.extract_strided_slice %64 {offsets = [0, 0, 64], sizes = [1, 16, 32], strides = [1, 1, 1]} : vector<1x16x128xf32> to vector<1x16x32xf32>
    %111 = arith.truncf %110 : vector<1x16x32xf32> to vector<1x16x32xbf16>
    %112 = vector.extract_strided_slice %65 {offsets = [0, 0, 64], sizes = [1, 16, 32], strides = [1, 1, 1]} : vector<1x16x128xf32> to vector<1x16x32xf32>
    %113 = arith.truncf %112 : vector<1x16x32xf32> to vector<1x16x32xbf16>
    "tpu.trace_start"() <{level = 10 : i32, message = "bld,bmd->blm"}> : () -> ()
    %cst_46 = arith.constant dense<0.000000e+00> : vector<1x16x16xf32>
    %114 = tpu.matmul %109, %111, %cst_46 {dimension_numbers = #tpu.dot_dimension_numbers<[2], [2], [1], [1], [0, 0, 0, 1, 1, 1], [0], [0]>} : vector<1x16x32xbf16>, vector<1x16x32xbf16>, vector<1x16x16xf32> -> vector<1x16x16xf32>
    "tpu.trace_stop"() : () -> ()
    %cst_47 = arith.constant dense<0xFF800000> : vector<1x16xf32>
    %115 = vector.multi_reduction <maximumf>, %114, %cst_47 [2] : vector<1x16x16xf32> to vector<1x16xf32>
    %116 = vector.shape_cast %115 : vector<1x16xf32> to vector<1x16x1xf32>
    %117 = vector.broadcast %116 : vector<1x16x1xf32> to vector<1x16x16xf32>
    %118 = arith.subf %114, %117 : vector<1x16x16xf32>
    %119 = math.exp %118 : vector<1x16x16xf32>
    %cst_48 = arith.constant dense<0.000000e+00> : vector<1x16xf32>
    %120 = vector.multi_reduction <add>, %119, %cst_48 [2] : vector<1x16x16xf32> to vector<1x16xf32>
    %121 = vector.shape_cast %120 : vector<1x16xf32> to vector<1x16x1xf32>
    %122 = tpu.reciprocal %121 {approx = true} : vector<1x16x1xf32> -> vector<1x16x1xf32>
    %123 = vector.broadcast %122 : vector<1x16x1xf32> to vector<1x16x16xf32>
    %124 = arith.mulf %119, %123 : vector<1x16x16xf32>
    %125 = arith.truncf %124 : vector<1x16x16xf32> to vector<1x16x16xbf16>
    "tpu.trace_start"() <{level = 10 : i32, message = "blm,bmd->bld"}> : () -> ()
    %cst_49 = arith.constant dense<0.000000e+00> : vector<1x16x32xf32>
    %126 = tpu.matmul %125, %113, %cst_49 {dimension_numbers = #tpu.dot_dimension_numbers<[2], [1], [1], [2], [0, 0, 0, 1, 1, 2], [0], [0]>} : vector<1x16x16xbf16>, vector<1x16x32xbf16>, vector<1x16x32xf32> -> vector<1x16x32xf32>
    "tpu.trace_stop"() : () -> ()
    %127 = vector.shape_cast %126 : vector<1x16x32xf32> to vector<16x32xf32>
    %c0_50 = arith.constant 0 : index
    %c64 = arith.constant 64 : index
    %128 = vector.load %arg21[%c0_50, %c64] : memref<16x128xf32, #tpu.memory_space<vmem>>, vector<16x32xf32>
    tpu.vector_store %arg21[%c0_50, %c64], %127 {strides = array<i32>} : memref<16x128xf32, #tpu.memory_space<vmem>>, vector<16x32xf32>,
    %129 = vector.extract_strided_slice %63 {offsets = [0, 0, 96], sizes = [1, 16, 32], strides = [1, 1, 1]} : vector<1x16x128xf32> to vector<1x16x32xf32>
    %130 = arith.truncf %129 : vector<1x16x32xf32> to vector<1x16x32xbf16>
    %131 = vector.extract_strided_slice %64 {offsets = [0, 0, 96], sizes = [1, 16, 32], strides = [1, 1, 1]} : vector<1x16x128xf32> to vector<1x16x32xf32>
    %132 = arith.truncf %131 : vector<1x16x32xf32> to vector<1x16x32xbf16>
    %133 = vector.extract_strided_slice %65 {offsets = [0, 0, 96], sizes = [1, 16, 32], strides = [1, 1, 1]} : vector<1x16x128xf32> to vector<1x16x32xf32>
    %134 = arith.truncf %133 : vector<1x16x32xf32> to vector<1x16x32xbf16>
    "tpu.trace_start"() <{level = 10 : i32, message = "bld,bmd->blm"}> : () -> ()
    %cst_51 = arith.constant dense<0.000000e+00> : vector<1x16x16xf32>
    %135 = tpu.matmul %130, %132, %cst_51 {dimension_numbers = #tpu.dot_dimension_numbers<[2], [2], [1], [1], [0, 0, 0, 1, 1, 1], [0], [0]>} : vector<1x16x32xbf16>, vector<1x16x32xbf16>, vector<1x16x16xf32> -> vector<1x16x16xf32>
    "tpu.trace_stop"() : () -> ()
    %cst_52 = arith.constant dense<0xFF800000> : vector<1x16xf32>
    %136 = vector.multi_reduction <maximumf>, %135, %cst_52 [2] : vector<1x16x16xf32> to vector<1x16xf32>
    %137 = vector.shape_cast %136 : vector<1x16xf32> to vector<1x16x1xf32>
    %138 = vector.broadcast %137 : vector<1x16x1xf32> to vector<1x16x16xf32>
    %139 = arith.subf %135, %138 : vector<1x16x16xf32>
    %140 = math.exp %139 : vector<1x16x16xf32>
    %cst_53 = arith.constant dense<0.000000e+00> : vector<1x16xf32>
    %141 = vector.multi_reduction <add>, %140, %cst_53 [2] : vector<1x16x16xf32> to vector<1x16xf32>
    %142 = vector.shape_cast %141 : vector<1x16xf32> to vector<1x16x1xf32>
    %143 = tpu.reciprocal %142 {approx = true} : vector<1x16x1xf32> -> vector<1x16x1xf32>
    %144 = vector.broadcast %143 : vector<1x16x1xf32> to vector<1x16x16xf32>
    %145 = arith.mulf %140, %144 : vector<1x16x16xf32>
    %146 = arith.truncf %145 : vector<1x16x16xf32> to vector<1x16x16xbf16>
    "tpu.trace_start"() <{level = 10 : i32, message = "blm,bmd->bld"}> : () -> ()
    %cst_54 = arith.constant dense<0.000000e+00> : vector<1x16x32xf32>
    %147 = tpu.matmul %146, %134, %cst_54 {dimension_numbers = #tpu.dot_dimension_numbers<[2], [1], [1], [2], [0, 0, 0, 1, 1, 2], [0], [0]>} : vector<1x16x16xbf16>, vector<1x16x32xbf16>, vector<1x16x32xf32> -> vector<1x16x32xf32>
    "tpu.trace_stop"() : () -> ()
    %148 = vector.shape_cast %147 : vector<1x16x32xf32> to vector<16x32xf32>
    %c0_55 = arith.constant 0 : index
    %c96 = arith.constant 96 : index
    %149 = vector.load %arg21[%c0_55, %c96] : memref<16x128xf32, #tpu.memory_space<vmem>>, vector<16x32xf32>
    tpu.vector_store %arg21[%c0_55, %c96], %148 {strides = array<i32>} : memref<16x128xf32, #tpu.memory_space<vmem>>, vector<16x32xf32>,
    %c0_56 = arith.constant 0 : index
    %c0_57 = arith.constant 0 : index
    %150 = vector.load %arg21[%c0_56, %c0_57] : memref<16x128xf32, #tpu.memory_space<vmem>>, vector<16x128xf32>
    %151 = arith.truncf %150 : vector<16x128xf32> to vector<16x128xbf16>
    %c0_58 = arith.constant 0 : index
    %c0_59 = arith.constant 0 : index
    %c0_60 = arith.constant 0 : index
    %152 = vector.load %arg9[%c0_58, %c0_59, %c0_60] : memref<1x128x128xbf16, #tpu.memory_space<vmem>>, vector<1x128x128xbf16>
    %153 = vector.shape_cast %152 : vector<1x128x128xbf16> to vector<128x128xbf16>
    %cst_61 = arith.constant dense<0.000000e+00> : vector<16x128xf32>
    %154 = tpu.matmul %151, %153, %cst_61 {dimension_numbers = #tpu.dot_dimension_numbers<[1], [0], [0], [1], [0, 0, 1, 1], [], []>} : vector<16x128xbf16>, vector<128x128xbf16>, vector<16x128xf32> -> vector<16x128xf32>
    %c0_62 = arith.constant 0 : index
    %c0_63 = arith.constant 0 : index
    %c0_64 = arith.constant 0 : index
    %155 = vector.load %arg10[%c0_62, %c0_63, %c0_64] : memref<1x1x128xf32, #tpu.memory_space<vmem>>, vector<1x1x128xf32>
    %156 = vector.shape_cast %155 : vector<1x1x128xf32> to vector<1x128xf32>
    %157 = vector.broadcast %156 : vector<1x128xf32> to vector<16x128xf32>
    %158 = arith.addf %154, %157 : vector<16x128xf32>
    %159 = arith.addf %158, %36 : vector<16x128xf32>
    %c0_65 = arith.constant 0 : index
    %c0_66 = arith.constant 0 : index
    %c0_67 = arith.constant 0 : index
    %160 = vector.load %arg17[%c0_65, %c0_66, %c0_67] : memref<1x1x128xf32, #tpu.memory_space<vmem>>, vector<1x1x128xf32>
    %161 = vector.shape_cast %160 : vector<1x1x128xf32> to vector<1x128xf32>
    %c0_68 = arith.constant 0 : index
    %c0_69 = arith.constant 0 : index
    %c0_70 = arith.constant 0 : index
    %162 = vector.load %arg18[%c0_68, %c0_69, %c0_70] : memref<1x1x128xf32, #tpu.memory_space<vmem>>, vector<1x1x128xf32>
    %163 = vector.shape_cast %162 : vector<1x1x128xf32> to vector<1x128xf32>
    %cst_71 = arith.constant dense<0.000000e+00> : vector<16xf32>
    %164 = vector.multi_reduction <add>, %159, %cst_71 [1] : vector<16x128xf32> to vector<16xf32>
    %165 = vector.shape_cast %164 : vector<16xf32> to vector<16x1xf32>
    %cst_72 = arith.constant 1.280000e+02 : f32
    %166 = vector.broadcast %cst_72 : f32 to vector<16x1xf32>
    %167 = arith.divf %165, %166 : vector<16x1xf32>
    %168 = vector.broadcast %167 : vector<16x1xf32> to vector<16x128xf32>
    %169 = arith.subf %159, %168 : vector<16x128xf32>
    %170 = arith.mulf %169, %169 : vector<16x128xf32>
    %cst_73 = arith.constant dense<0.000000e+00> : vector<16xf32>
    %171 = vector.multi_reduction <add>, %170, %cst_73 [1] : vector<16x128xf32> to vector<16xf32>
    %172 = vector.shape_cast %171 : vector<16xf32> to vector<16x1xf32>
    %cst_74 = arith.constant 1.280000e+02 : f32
    %173 = vector.broadcast %cst_74 : f32 to vector<16x1xf32>
    %174 = arith.divf %172, %173 : vector<16x1xf32>
    %175 = vector.broadcast %167 : vector<16x1xf32> to vector<16x128xf32>
    %176 = arith.subf %159, %175 : vector<16x128xf32>
    %cst_75 = arith.constant 9.99999997E-7 : f32
    %177 = vector.broadcast %cst_75 : f32 to vector<16x1xf32>
    %178 = arith.addf %174, %177 : vector<16x1xf32>
    %179 = math.rsqrt %178 : vector<16x1xf32>
    %180 = vector.broadcast %179 : vector<16x1xf32> to vector<16x128xf32>
    %181 = arith.mulf %176, %180 : vector<16x128xf32>
    %182 = vector.broadcast %161 : vector<1x128xf32> to vector<16x128xf32>
    %183 = arith.mulf %181, %182 : vector<16x128xf32>
    %184 = vector.broadcast %163 : vector<1x128xf32> to vector<16x128xf32>
    %185 = arith.addf %183, %184 : vector<16x128xf32>
    %186 = arith.truncf %185 : vector<16x128xf32> to vector<16x128xbf16>
    %c0_76 = arith.constant 0 : index
    %c0_77 = arith.constant 0 : index
    %c0_78 = arith.constant 0 : index
    %187 = vector.load %arg13[%c0_76, %c0_77, %c0_78] : memref<1x128x256xbf16, #tpu.memory_space<vmem>>, vector<1x128x256xbf16>
    %188 = vector.shape_cast %187 : vector<1x128x256xbf16> to vector<128x256xbf16>
    %cst_79 = arith.constant dense<0.000000e+00> : vector<16x256xf32>
    %189 = tpu.matmul %186, %188, %cst_79 {dimension_numbers = #tpu.dot_dimension_numbers<[1], [0], [0], [1], [0, 0, 1, 1], [], []>} : vector<16x128xbf16>, vector<128x256xbf16>, vector<16x256xf32> -> vector<16x256xf32>
    %c0_80 = arith.constant 0 : index
    %c0_81 = arith.constant 0 : index
    %c0_82 = arith.constant 0 : index
    %190 = vector.load %arg14[%c0_80, %c0_81, %c0_82] : memref<1x1x256xf32, #tpu.memory_space<vmem>>, vector<1x1x256xf32>
    %191 = vector.shape_cast %190 : vector<1x1x256xf32> to vector<1x256xf32>
    %192 = vector.broadcast %191 : vector<1x256xf32> to vector<16x256xf32>
    %193 = arith.addf %189, %192 : vector<16x256xf32>
    %cst_83 = arith.constant 5.000000e-01 : f32
    %194 = vector.broadcast %cst_83 : f32 to vector<16x256xf32>
    %195 = arith.mulf %194, %193 : vector<16x256xf32>
    %cst_84 = arith.constant 4.471500e-02 : f32
    %196 = vector.broadcast %cst_84 : f32 to vector<16x256xf32>
    %197 = arith.mulf %196, %193 : vector<16x256xf32>
    %198 = arith.mulf %197, %193 : vector<16x256xf32>
    %199 = arith.mulf %198, %193 : vector<16x256xf32>
    %200 = arith.addf %193, %199 : vector<16x256xf32>
    %cst_85 = arith.constant 0.797884583 : f32
    %201 = vector.broadcast %cst_85 : f32 to vector<16x256xf32>
    %202 = arith.mulf %201, %200 : vector<16x256xf32>
    %203 = math.tanh %202 : vector<16x256xf32>
    %cst_86 = arith.constant 1.000000e+00 : f32
    %204 = vector.broadcast %cst_86 : f32 to vector<16x256xf32>
    %205 = arith.addf %204, %203 : vector<16x256xf32>
    %206 = arith.mulf %195, %205 : vector<16x256xf32>
    %207 = arith.truncf %206 : vector<16x256xf32> to vector<16x256xbf16>
    %c0_87 = arith.constant 0 : index
    %c0_88 = arith.constant 0 : index
    %c0_89 = arith.constant 0 : index
    %208 = vector.load %arg15[%c0_87, %c0_88, %c0_89] : memref<1x256x128xbf16, #tpu.memory_space<vmem>>, vector<1x256x128xbf16>
    %209 = vector.shape_cast %208 : vector<1x256x128xbf16> to vector<256x128xbf16>
    %cst_90 = arith.constant dense<0.000000e+00> : vector<16x128xf32>
    %210 = tpu.matmul %207, %209, %cst_90 {dimension_numbers = #tpu.dot_dimension_numbers<[1], [0], [0], [1], [0, 0, 1, 1], [], []>} : vector<16x256xbf16>, vector<256x128xbf16>, vector<16x128xf32> -> vector<16x128xf32>
    %c0_91 = arith.constant 0 : index
    %c0_92 = arith.constant 0 : index
    %c0_93 = arith.constant 0 : index
    %211 = vector.load %arg16[%c0_91, %c0_92, %c0_93] : memref<1x1x128xf32, #tpu.memory_space<vmem>>, vector<1x1x128xf32>
    %212 = vector.shape_cast %211 : vector<1x1x128xf32> to vector<1x128xf32>
    %213 = vector.broadcast %212 : vector<1x128xf32> to vector<16x128xf32>
    %214 = arith.addf %210, %213 : vector<16x128xf32>
    %215 = arith.addf %214, %159 : vector<16x128xf32>
    %c0_94 = arith.constant 0 : index
    %c0_95 = arith.constant 0 : index
    %216 = vector.load %arg20[%c0_94, %c0_95] : memref<16x128xf32, #tpu.memory_space<vmem>>, vector<16x128xf32>
    tpu.vector_store %arg20[%c0_94, %c0_95], %215 {strides = array<i32>} : memref<16x128xf32, #tpu.memory_space<vmem>>, vector<16x128xf32>,
    %c1_i32 = arith.constant 1 : i32
    %217 = arith.cmpi eq, %arg1, %c1_i32 : i32
    %218 = arith.extui %217 : i1 to i32
    %c0_i32_96 = arith.constant 0 : i32
    %219 = arith.cmpi ne, %218, %c0_i32_96 : i32
    scf.if %219 {
      %220 = vector.shape_cast %215 : vector<16x128xf32> to vector<1x16x128xf32>
      %c0_97 = arith.constant 0 : index
      %c0_98 = arith.constant 0 : index
      %c0_99 = arith.constant 0 : index
      %221 = vector.load %arg19[%c0_97, %c0_98, %c0_99] : memref<1x16x128xf32, #tpu.memory_space<vmem>>, vector<1x16x128xf32>
      tpu.vector_store %arg19[%c0_97, %c0_98, %c0_99], %220 {strides = array<i32>} : memref<1x16x128xf32, #tpu.memory_space<vmem>>, vector<1x16x128xf32>,
    } else {
    }
    return
  }
  func.func @transform_0(%arg0: i32, %arg1: i32) -> (i32, i32, i32) {
    %c0_i32 = arith.constant 0 : i32
    %c0_i32_0 = arith.constant 0 : i32
    %c0_i32_1 = arith.constant 0 : i32
    return %arg0, %c0_i32, %c0_i32_0 : i32, i32, i32
  }
  func.func @transform_1(%arg0: i32, %arg1: i32) -> (i32, i32, i32) {
    %c0_i32 = arith.constant 0 : i32
    %c0_i32_0 = arith.constant 0 : i32
    %c0_i32_1 = arith.constant 0 : i32
    return %arg1, %c0_i32, %c0_i32_0 : i32, i32, i32
  }
  func.func @transform_2(%arg0: i32, %arg1: i32) -> (i32, i32, i32) {
    %c0_i32 = arith.constant 0 : i32
    %c0_i32_0 = arith.constant 0 : i32
    %c0_i32_1 = arith.constant 0 : i32
    return %arg1, %c0_i32, %c0_i32_0 : i32, i32, i32
  }
  func.func @transform_3(%arg0: i32, %arg1: i32) -> (i32, i32, i32) {
    %c0_i32 = arith.constant 0 : i32
    %c0_i32_0 = arith.constant 0 : i32
    %c0_i32_1 = arith.constant 0 : i32
    return %arg1, %c0_i32, %c0_i32_0 : i32, i32, i32
  }
  func.func @transform_4(%arg0: i32, %arg1: i32) -> (i32, i32, i32) {
    %c0_i32 = arith.constant 0 : i32
    %c0_i32_0 = arith.constant 0 : i32
    %c0_i32_1 = arith.constant 0 : i32
    return %arg1, %c0_i32, %c0_i32_0 : i32, i32, i32
  }
  func.func @transform_5(%arg0: i32, %arg1: i32) -> (i32, i32, i32) {
    %c0_i32 = arith.constant 0 : i32
    %c0_i32_0 = arith.constant 0 : i32
    %c0_i32_1 = arith.constant 0 : i32
    return %arg1, %c0_i32, %c0_i32_0 : i32, i32, i32
  }
  func.func @transform_6(%arg0: i32, %arg1: i32) -> (i32, i32, i32) {
    %c0_i32 = arith.constant 0 : i32
    %c0_i32_0 = arith.constant 0 : i32
    %c0_i32_1 = arith.constant 0 : i32
    return %arg1, %c0_i32, %c0_i32_0 : i32, i32, i32
  }
  func.func @transform_7(%arg0: i32, %arg1: i32) -> (i32, i32, i32) {
    %c0_i32 = arith.constant 0 : i32
    %c0_i32_0 = arith.constant 0 : i32
    %c0_i32_1 = arith.constant 0 : i32
    return %arg1, %c0_i32, %c0_i32_0 : i32, i32, i32
  }
  func.func @transform_8(%arg0: i32, %arg1: i32) -> (i32, i32, i32) {
    %c0_i32 = arith.constant 0 : i32
    %c0_i32_0 = arith.constant 0 : i32
    %c0_i32_1 = arith.constant 0 : i32
    return %arg1, %c0_i32, %c0_i32_0 : i32, i32, i32
  }
  func.func @transform_9(%arg0: i32, %arg1: i32) -> (i32, i32, i32) {
    %c0_i32 = arith.constant 0 : i32
    %c0_i32_0 = arith.constant 0 : i32
    %c0_i32_1 = arith.constant 0 : i32
    return %arg1, %c0_i32, %c0_i32_0 : i32, i32, i32
  }
  func.func @transform_10(%arg0: i32, %arg1: i32) -> (i32, i32, i32) {
    %c0_i32 = arith.constant 0 : i32
    %c0_i32_0 = arith.constant 0 : i32
    %c0_i32_1 = arith.constant 0 : i32
    return %arg1, %c0_i32, %c0_i32_0 : i32, i32, i32
  }
  func.func @transform_11(%arg0: i32, %arg1: i32) -> (i32, i32, i32) {
    %c0_i32 = arith.constant 0 : i32
    %c0_i32_0 = arith.constant 0 : i32
    %c0_i32_1 = arith.constant 0 : i32
    return %arg1, %c0_i32, %c0_i32_0 : i32, i32, i32
  }
  func.func @transform_12(%arg0: i32, %arg1: i32) -> (i32, i32, i32) {
    %c0_i32 = arith.constant 0 : i32
    %c0_i32_0 = arith.constant 0 : i32
    %c0_i32_1 = arith.constant 0 : i32
    return %arg1, %c0_i32, %c0_i32_0 : i32, i32, i32
  }
  func.func @transform_13(%arg0: i32, %arg1: i32) -> (i32, i32, i32) {
    %c0_i32 = arith.constant 0 : i32
    %c0_i32_0 = arith.constant 0 : i32
    %c0_i32_1 = arith.constant 0 : i32
    return %arg1, %c0_i32, %c0_i32_0 : i32, i32, i32
  }
  func.func @transform_14(%arg0: i32, %arg1: i32) -> (i32, i32, i32) {
    %c0_i32 = arith.constant 0 : i32
    %c0_i32_0 = arith.constant 0 : i32
    %c0_i32_1 = arith.constant 0 : i32
    return %arg1, %c0_i32, %c0_i32_0 : i32, i32, i32
  }
  func.func @transform_15(%arg0: i32, %arg1: i32) -> (i32, i32, i32) {
    %c0_i32 = arith.constant 0 : i32
    %c0_i32_0 = arith.constant 0 : i32
    %c0_i32_1 = arith.constant 0 : i32
    return %arg1, %c0_i32, %c0_i32_0 : i32, i32, i32
  }
  func.func @transform_16(%arg0: i32, %arg1: i32) -> (i32, i32, i32) {
    %c0_i32 = arith.constant 0 : i32
    %c0_i32_0 = arith.constant 0 : i32
    %c0_i32_1 = arith.constant 0 : i32
    return %arg1, %c0_i32, %c0_i32_0 : i32, i32, i32
  }
  func.func @transform_17(%arg0: i32, %arg1: i32) -> (i32, i32, i32) {
    %c0_i32 = arith.constant 0 : i32
    %c0_i32_0 = arith.constant 0 : i32
    %c0_i32_1 = arith.constant 0 : i32
    return %arg0, %c0_i32, %c0_i32_0 : i32, i32, i32
  }
}

</mosaic_0001>

<llo_original>
// kernel: tpu_custom_call.1
$region0: #{tpu_custom_call.1}
  #allocation0 [shape = 'u32[]', space=smem, size = 0x4, offset = 0x4, fixed_abs, tag = 'smem constant byte address 0x4 - core index']
  #allocation1 [shape = 'u32[72,128]{1,0:T(1,128)}', space=vmem, size = 0x9000, scoped, tag = 'internal scratch']
  #allocation2 [shape = 'f32[16,128]{1,0:T(8,128)}', space=vmem, size = 0x2000, scoped, tag = 'scratch operand']
  #allocation3 [shape = 'f32[16,128]{1,0:T(8,128)}', space=vmem, size = 0x2000, scoped, tag = 'scratch operand']
  %s0 = inlined_call_operand.hbm [shape: f32[2,16,128], index: 0, kind: input, shape index: {}]
  %s1 = inlined_call_operand.hbm [shape: bf16[2,128,128], index: 1, kind: input, shape index: {}]
  %s2 = inlined_call_operand.hbm [shape: f32[2,1,128], index: 2, kind: input, shape index: {}]
  %s3 = inlined_call_operand.hbm [shape: bf16[2,128,128], index: 3, kind: input, shape index: {}]
  %s4 = inlined_call_operand.vmem [shape: f32[2,1,128], index: 4, kind: input, shape index: {}]
  %s5 = inlined_call_operand.hbm [shape: bf16[2,128,128], index: 5, kind: input, shape index: {}]
  %s6 = inlined_call_operand.hbm [shape: f32[2,1,128], index: 6, kind: input, shape index: {}]
  %s7 = inlined_call_operand.hbm [shape: bf16[2,128,128], index: 7, kind: input, shape index: {}]
  %s8 = inlined_call_operand.hbm [shape: f32[2,1,128], index: 8, kind: input, shape index: {}]
  %s9 = inlined_call_operand.vmem [shape: f32[2,1,128], index: 9, kind: input, shape index: {}]
  %s10 = inlined_call_operand.hbm [shape: f32[2,1,128], index: 10, kind: input, shape index: {}]
  %s11 = inlined_call_operand.hbm [shape: bf16[2,128,256], index: 11, kind: input, shape index: {}]
  %s12 = inlined_call_operand.vmem [shape: f32[2,1,256], index: 12, kind: input, shape index: {}]
  %s13 = inlined_call_operand.hbm [shape: bf16[2,256,128], index: 13, kind: input, shape index: {}]
  %s14 = inlined_call_operand.vmem [shape: f32[2,1,128], index: 14, kind: input, shape index: {}]
  %s15 = inlined_call_operand.vmem [shape: f32[2,1,128], index: 15, kind: input, shape index: {}]
  %s16 = inlined_call_operand.vmem [shape: f32[2,1,128], index: 16, kind: input, shape index: {}]
  %s17 = inlined_call_operand.hbm [shape: f32[2,16,128], index: 17, kind: output, shape index: {}]
  %s18 = sld [smem:[#allocation0]]
  $region153: #{tpu_custom_call.1} parent=0
    _
  %s20 = ssub.s32 1, %s18
  %s21 = scalar_select 0, %s20, %s18
  $region1: #{tpu_custom_call.1} parent=0
    #allocation4 [shape = 'u8[16384]{0}', space=vmem, size = 0x4000, scoped, tag = 'input window, operand 0']
    #allocation5 [shape = 's32[2]{0}', space=sflag, size = 0x8, scoped, tag = 'scoped memory for tpu_custom_call.1']
    #allocation6 [shape = 's32[2]{0}', space=sflag, size = 0x8, scoped, tag = 'scoped memory for tpu_custom_call.1']
    #allocation7 [shape = 'u8[65536]{0}', space=vmem, size = 0x10000, scoped, tag = 'input window, operand 1']
    #allocation8 [shape = 's32[2]{0}', space=sflag, size = 0x8, scoped, tag = 'scoped memory for tpu_custom_call.1']
    #allocation9 [shape = 'u8[1024]{0}', space=vmem, size = 0x400, scoped, tag = 'input window, operand 2']
    #allocation10 [shape = 'u8[65536]{0}', space=vmem, size = 0x10000, scoped, tag = 'input window, operand 3']
    #allocation11 [shape = 's32[2]{0}', space=sflag, size = 0x8, scoped, tag = 'scoped memory for tpu_custom_call.1']
    #allocation12 [shape = 'u8[65536]{0}', space=vmem, size = 0x10000, scoped, tag = 'input window, operand 5']
    #allocation13 [shape = 'u8[1024]{0}', space=vmem, size = 0x400, scoped, tag = 'input window, operand 6']
    #allocation14 [shape = 's32[2]{0}', space=sflag, size = 0x8, scoped, tag = 'scoped memory for tpu_custom_call.1']
    #allocation15 [shape = 'u8[65536]{0}', space=vmem, size = 0x10000, scoped, tag = 'input window, operand 7']
    #allocation16 [shape = 'u8[1024]{0}', space=vmem, size = 0x400, scoped, tag = 'input window, operand 8']
    #allocation17 [shape = 's32[2]{0}', space=sflag, size = 0x8, scoped, tag = 'scoped memory for tpu_custom_call.1']
    #allocation18 [shape = 'u8[1024]{0}', space=vmem, size = 0x400, scoped, tag = 'input window, operand 10']
    #allocation19 [shape = 'u8[131072]{0}', space=vmem, size = 0x20000, scoped, tag = 'input window, operand 11']
    #allocation20 [shape = 's32[2]{0}', space=sflag, size = 0x8, scoped, tag = 'scoped memory for tpu_custom_call.1']
    #allocation21 [shape = 'u8[131072]{0}', space=vmem, size = 0x20000, scoped, tag = 'input window, operand 13']
    #allocation22 [shape = 'u8[16384]{0}', space=vmem, size = 0x4000, scoped, tag = 'output window, operand 0']
    %22 = vsyncpa [#allocation5], 0
    %s23 = scalar_lea.sflag [#allocation5], 1
    %24 = vsyncpa %s23, 0
    %25 = vsyncpa [#allocation8], 0
    %s26 = scalar_lea.sflag [#allocation8], 1
    %27 = vsyncpa %s26, 0
    %28 = vsyncpa [#allocation11], 0
    %s29 = scalar_lea.sflag [#allocation11], 1
    %30 = vsyncpa %s29, 0
    %31 = vsyncpa [#allocation14], 0
    %s32 = scalar_lea.sflag [#allocation14], 1
    %33 = vsyncpa %s32, 0
    %34 = vsyncpa [#allocation17], 0
    %s35 = scalar_lea.sflag [#allocation17], 1
    %36 = vsyncpa %s35, 0
    %37 = vsyncpa [#allocation20], 0
    %s38 = scalar_lea.sflag [#allocation20], 1
    %39 = vsyncpa %s38, 0
    %40 = vsyncpa [#allocation6], 0
    %s41 = scalar_lea.sflag [#allocation6], 1
    %42 = vsyncpa %s41, 0
    loop: start=0, step=1, limit=6
    $region2: #{tpu_custom_call.1} parent=1 // loop_pre_header
      _
    $region3: #{tpu_custom_call.1} parent=1 // loop_header
      %s44 = sphi 0, %s48
      %p45 = scmp.ge.s32.totalorder %s44, 6
      %s51 = sphi 0, %s63
      %s52 = sphi 0, %s59
      %s53 = sphi 0, %s51
      %s54 = sphi 0, %s52
      %s55 = sphi 0, %s53
      %s56 = sphi 0, %s54
      %s66 = sphi 0, %s68
      %s69 = sphi 0, %s66
      %s70 = sphi 0, %s69
      %s86 = sphi 0, %s70
      %s92 = sphi 0, %s94
      %s95 = sphi 0, %s92
      %s96 = sphi 0, %s95
      %s112 = sphi 0, %s96
      %s118 = sphi 0, %s120
      %s121 = sphi 0, %s118
      %s122 = sphi 0, %s121
      %s138 = sphi 0, %s122
      %s144 = sphi 0, %s146
      %s147 = sphi 0, %s144
      %s148 = sphi 0, %s147
      %s164 = sphi 0, %s148
      %s170 = sphi 0, %s172
      %s173 = sphi 0, %s170
      %s174 = sphi 0, %s173
      %s190 = sphi 0, %s174
      %s196 = sphi 0, %s198
      %s199 = sphi 0, %s196
      %s200 = sphi 0, %s199
      %s216 = sphi 0, %s200
      %s222 = sphi 0, %s224
      %s225 = sphi 0, %s222
      %s226 = sphi 0, %s225
      %s242 = sphi 0, %s226
      %s248 = sphi 0, %s250
      %s251 = sphi 0, %s248
      %s252 = sphi 0, %s251
      %s268 = sphi 0, %s252
      %s274 = sphi 0, %s276
      %s277 = sphi 0, %s274
      %s278 = sphi 0, %s277
      %s294 = sphi 0, %s278
      %s300 = sphi 0, %s302
      %s303 = sphi 0, %s300
      %s304 = sphi 0, %s303
      %s320 = sphi 0, %s304
      %s326 = sphi 0, %s328
      %s329 = sphi 0, %s326
      %s330 = sphi 0, %s329
      %s346 = sphi 0, %s330
      %s352 = sphi 0, %s354
      %s355 = sphi 0, %s352
      %s356 = sphi 0, %s355
      %s372 = sphi 0, %s356
      %s378 = sphi 0, %s380
      %s381 = sphi 0, %s378
      %s382 = sphi 0, %s381
      %s398 = sphi 0, %s382
      %s404 = sphi 0, %s406
      %s407 = sphi 0, %s404
      %s408 = sphi 0, %s407
      %s424 = sphi 0, %s408
      %s430 = sphi 0, %s432
      %s433 = sphi 0, %s430
      %s434 = sphi 0, %s433
      %s450 = sphi 0, %s434
      %s456 = sphi 0, %s458
      %s459 = sphi 0, %s456
      %s460 = sphi 0, %s459
      %s476 = sphi 0, %s460
      %s482 = sphi 0, %s484
      %s485 = sphi 0, %s482
      %s486 = sphi 0, %s485
      %s502 = sphi 0, %s486
      %s508 = sphi 0, %s510
      %s511 = sphi 0, %s508
      %s512 = sphi 0, %s511
      %s528 = sphi 0, %s512
    $region4: #{tpu_custom_call.1} parent=1 // loop_header_branch
      %47 = sbr.rel (%p45) target = $region8
    $region5: #{tpu_custom_call.1} parent=1 // loop_body
      %s49 = ssub.s32 %s44, 1
      %s50 = ssub.s32 %s44, 2
      %s57 = sadd.s32 1, %s52
      %p58 = scmp.ge.s32.totalorder %s57, 2
      %s59 = scalar_select %p58, 0, %s57
      %s60 = sadd.s32 1, %s51
      %s61 = scalar_select %p58, %s60, %s51
      %p62 = scmp.ge.s32.totalorder %s61, 2
      %s63 = scalar_select %p62, 0, %s61
      %s64 = ssub.s32 %s51, %s63
      %p65 = scmp.eq.s32.totalorder %s64, 0
      %s67 = sadd.s32 %s66, 1
      %s68 = scalar_select %p65, %s66, %s67
      %p71 = pneg %p65
      %p72 = scmp.eq.s32.totalorder %s44, 3
      %p73 = por %p71, %p72
      %p74 = scmp.ne.s32.totalorder %s66, %s69
      %p75 = scmp.eq.s32.totalorder %s44, 0
      %p76 = por %p74, %p75
      %p77 = scmp.ne.s32.totalorder %s66, %s69
      %p78 = scmp.eq.s32.totalorder %s49, 3
      %p79 = por %p77, %p78
      %p80 = scmp.ne.s32.totalorder %s69, %s70
      %p81 = scmp.eq.s32.totalorder %s49, 0
      %p82 = por %p80, %p81
      %p83 = scmp.ne.s32.totalorder %s69, %s70
      %p84 = scmp.eq.s32.totalorder %s50, 3
      %p85 = por %p83, %p84
      %p87 = scmp.ne.s32.totalorder %s70, %s86
      %p88 = scmp.eq.s32.totalorder %s50, 0
      %p89 = por %p87, %p88
      %s90 = ssub.s32 %s52, %s59
      %p91 = scmp.eq.s32.totalorder %s90, 0
      %s93 = sadd.s32 %s92, 1
      %s94 = scalar_select %p91, %s92, %s93
      %p97 = pneg %p91
      %p98 = scmp.eq.s32.totalorder %s44, 3
      %p99 = por %p97, %p98
      %p100 = scmp.ne.s32.totalorder %s92, %s95
      %p101 = scmp.eq.s32.totalorder %s44, 0
      %p102 = por %p100, %p101
      %p103 = scmp.ne.s32.totalorder %s92, %s95
      %p104 = scmp.eq.s32.totalorder %s49, 3
      %p105 = por %p103, %p104
      %p106 = scmp.ne.s32.totalorder %s95, %s96
      %p107 = scmp.eq.s32.totalorder %s49, 0
      %p108 = por %p106, %p107
      %p109 = scmp.ne.s32.totalorder %s95, %s96
      %p110 = scmp.eq.s32.totalorder %s50, 3
      %p111 = por %p109, %p110
      %p113 = scmp.ne.s32.totalorder %s96, %s112
      %p114 = scmp.eq.s32.totalorder %s50, 0
      %p115 = por %p113, %p114
      %s116 = ssub.s32 %s52, %s59
      %p117 = scmp.eq.s32.totalorder %s116, 0
      %s119 = sadd.s32 %s118, 1
      %s120 = scalar_select %p117, %s118, %s119
      %p123 = pneg %p117
      %p124 = scmp.eq.s32.totalorder %s44, 3
      %p125 = por %p123, %p124
      %p126 = scmp.ne.s32.totalorder %s118, %s121
      %p127 = scmp.eq.s32.totalorder %s44, 0
      %p128 = por %p126, %p127
      %p129 = scmp.ne.s32.totalorder %s118, %s121
      %p130 = scmp.eq.s32.totalorder %s49, 3
      %p131 = por %p129, %p130
      %p132 = scmp.ne.s32.totalorder %s121, %s122
      %p133 = scmp.eq.s32.totalorder %s49, 0
      %p134 = por %p132, %p133
      %p135 = scmp.ne.s32.totalorder %s121, %s122
      %p136 = scmp.eq.s32.totalorder %s50, 3
      %p137 = por %p135, %p136
      %p139 = scmp.ne.s32.totalorder %s122, %s138
      %p140 = scmp.eq.s32.totalorder %s50, 0
      %p141 = por %p139, %p140
      %s142 = ssub.s32 %s52, %s59
      %p143 = scmp.eq.s32.totalorder %s142, 0
      %s145 = sadd.s32 %s144, 1
      %s146 = scalar_select %p143, %s144, %s145
      %p149 = pneg %p143
      %p150 = scmp.eq.s32.totalorder %s44, 3
      %p151 = por %p149, %p150
      %p152 = scmp.ne.s32.totalorder %s144, %s147
      %p153 = scmp.eq.s32.totalorder %s44, 0
      %p154 = por %p152, %p153
      %p155 = scmp.ne.s32.totalorder %s144, %s147
      %p156 = scmp.eq.s32.totalorder %s49, 3
      %p157 = por %p155, %p156
      %p158 = scmp.ne.s32.totalorder %s147, %s148
      %p159 = scmp.eq.s32.totalorder %s49, 0
      %p160 = por %p158, %p159
      %p161 = scmp.ne.s32.totalorder %s147, %s148
      %p162 = scmp.eq.s32.totalorder %s50, 3
      %p163 = por %p161, %p162
      %p165 = scmp.ne.s32.totalorder %s148, %s164
      %p166 = scmp.eq.s32.totalorder %s50, 0
      %p167 = por %p165, %p166
      %s168 = ssub.s32 %s52, %s59
      %p169 = scmp.eq.s32.totalorder %s168, 0
      %s171 = sadd.s32 %s170, 1
      %s172 = scalar_select %p169, %s170, %s171
      %p175 = pneg %p169
      %p176 = scmp.eq.s32.totalorder %s44, 3
      %p177 = por %p175, %p176
      %p178 = scmp.ne.s32.totalorder %s170, %s173
      %p179 = scmp.eq.s32.totalorder %s44, 0
      %p180 = por %p178, %p179
      %p181 = scmp.ne.s32.totalorder %s170, %s173
      %p182 = scmp.eq.s32.totalorder %s49, 3
      %p183 = por %p181, %p182
      %p184 = scmp.ne.s32.totalorder %s173, %s174
      %p185 = scmp.eq.s32.totalorder %s49, 0
      %p186 = por %p184, %p185
      %p187 = scmp.ne.s32.totalorder %s173, %s174
      %p188 = scmp.eq.s32.totalorder %s50, 3
      %p189 = por %p187, %p188
      %p191 = scmp.ne.s32.totalorder %s174, %s190
      %p192 = scmp.eq.s32.totalorder %s50, 0
      %p193 = por %p191, %p192
      %s194 = ssub.s32 %s52, %s59
      %p195 = scmp.eq.s32.totalorder %s194, 0
      %s197 = sadd.s32 %s196, 1
      %s198 = scalar_select %p195, %s196, %s197
      %p201 = pneg %p195
      %p202 = scmp.eq.s32.totalorder %s44, 3
      %p203 = por %p201, %p202
      %p204 = scmp.ne.s32.totalorder %s196, %s199
      %p205 = scmp.eq.s32.totalorder %s44, 0
      %p206 = por %p204, %p205
      %p207 = scmp.ne.s32.totalorder %s196, %s199
      %p208 = scmp.eq.s32.totalorder %s49, 3
      %p209 = por %p207, %p208
      %p210 = scmp.ne.s32.totalorder %s199, %s200
      %p211 = scmp.eq.s32.totalorder %s49, 0
      %p212 = por %p210, %p211
      %p213 = scmp.ne.s32.totalorder %s199, %s200
      %p214 = scmp.eq.s32.totalorder %s50, 3
      %p215 = por %p213, %p214
      %p217 = scmp.ne.s32.totalorder %s200, %s216
      %p218 = scmp.eq.s32.totalorder %s50, 0
      %p219 = por %p217, %p218
      %s220 = ssub.s32 %s52, %s59
      %p221 = scmp.eq.s32.totalorder %s220, 0
      %s223 = sadd.s32 %s222, 1
      %s224 = scalar_select %p221, %s222, %s223
      %p227 = pneg %p221
      %p228 = scmp.eq.s32.totalorder %s44, 3
      %p229 = por %p227, %p228
      %p230 = scmp.ne.s32.totalorder %s222, %s225
      %p231 = scmp.eq.s32.totalorder %s44, 0
      %p232 = por %p230, %p231
      %p233 = scmp.ne.s32.totalorder %s222, %s225
      %p234 = scmp.eq.s32.totalorder %s49, 3
      %p235 = por %p233, %p234
      %p236 = scmp.ne.s32.totalorder %s225, %s226
      %p237 = scmp.eq.s32.totalorder %s49, 0
      %p238 = por %p236, %p237
      %p239 = scmp.ne.s32.totalorder %s225, %s226
      %p240 = scmp.eq.s32.totalorder %s50, 3
      %p241 = por %p239, %p240
      %p243 = scmp.ne.s32.totalorder %s226, %s242
      %p244 = scmp.eq.s32.totalorder %s50, 0
      %p245 = por %p243, %p244
      %s246 = ssub.s32 %s52, %s59
      %p247 = scmp.eq.s32.totalorder %s246, 0
      %s249 = sadd.s32 %s248, 1
      %s250 = scalar_select %p247, %s248, %s249
      %p253 = pneg %p247
      %p254 = scmp.eq.s32.totalorder %s44, 3
      %p255 = por %p253, %p254
      %p256 = scmp.ne.s32.totalorder %s248, %s251
      %p257 = scmp.eq.s32.totalorder %s44, 0
      %p258 = por %p256, %p257
      %p259 = scmp.ne.s32.totalorder %s248, %s251
      %p260 = scmp.eq.s32.totalorder %s49, 3
      %p261 = por %p259, %p260
      %p262 = scmp.ne.s32.totalorder %s251, %s252
      %p263 = scmp.eq.s32.totalorder %s49, 0
      %p264 = por %p262, %p263
      %p265 = scmp.ne.s32.totalorder %s251, %s252
      %p266 = scmp.eq.s32.totalorder %s50, 3
      %p267 = por %p265, %p266
      %p269 = scmp.ne.s32.totalorder %s252, %s268
      %p270 = scmp.eq.s32.totalorder %s50, 0
      %p271 = por %p269, %p270
      %s272 = ssub.s32 %s52, %s59
      %p273 = scmp.eq.s32.totalorder %s272, 0
      %s275 = sadd.s32 %s274, 1
      %s276 = scalar_select %p273, %s274, %s275
      %p279 = pneg %p273
      %p280 = scmp.eq.s32.totalorder %s44, 3
      %p281 = por %p279, %p280
      %p282 = scmp.ne.s32.totalorder %s274, %s277
      %p283 = scmp.eq.s32.totalorder %s44, 0
      %p284 = por %p282, %p283
      %p285 = scmp.ne.s32.totalorder %s274, %s277
      %p286 = scmp.eq.s32.totalorder %s49, 3
      %p287 = por %p285, %p286
      %p288 = scmp.ne.s32.totalorder %s277, %s278
      %p289 = scmp.eq.s32.totalorder %s49, 0
      %p290 = por %p288, %p289
      %p291 = scmp.ne.s32.totalorder %s277, %s278
      %p292 = scmp.eq.s32.totalorder %s50, 3
      %p293 = por %p291, %p292
      %p295 = scmp.ne.s32.totalorder %s278, %s294
      %p296 = scmp.eq.s32.totalorder %s50, 0
      %p297 = por %p295, %p296
      %s298 = ssub.s32 %s52, %s59
      %p299 = scmp.eq.s32.totalorder %s298, 0
      %s301 = sadd.s32 %s300, 1
      %s302 = scalar_select %p299, %s300, %s301
      %p305 = pneg %p299
      %p306 = scmp.eq.s32.totalorder %s44, 3
      %p307 = por %p305, %p306
      %p308 = scmp.ne.s32.totalorder %s300, %s303
      %p309 = scmp.eq.s32.totalorder %s44, 0
      %p310 = por %p308, %p309
      %p311 = scmp.ne.s32.totalorder %s300, %s303
      %p312 = scmp.eq.s32.totalorder %s49, 3
      %p313 = por %p311, %p312
      %p314 = scmp.ne.s32.totalorder %s303, %s304
      %p315 = scmp.eq.s32.totalorder %s49, 0
      %p316 = por %p314, %p315
      %p317 = scmp.ne.s32.totalorder %s303, %s304
      %p318 = scmp.eq.s32.totalorder %s50, 3
      %p319 = por %p317, %p318
      %p321 = scmp.ne.s32.totalorder %s304, %s320
      %p322 = scmp.eq.s32.totalorder %s50, 0
      %p323 = por %p321, %p322
      %s324 = ssub.s32 %s52, %s59
      %p325 = scmp.eq.s32.totalorder %s324, 0
      %s327 = sadd.s32 %s326, 1
      %s328 = scalar_select %p325, %s326, %s327
      %p331 = pneg %p325
      %p332 = scmp.eq.s32.totalorder %s44, 3
      %p333 = por %p331, %p332
      %p334 = scmp.ne.s32.totalorder %s326, %s329
      %p335 = scmp.eq.s32.totalorder %s44, 0
      %p336 = por %p334, %p335
      %p337 = scmp.ne.s32.totalorder %s326, %s329
      %p338 = scmp.eq.s32.totalorder %s49, 3
      %p339 = por %p337, %p338
      %p340 = scmp.ne.s32.totalorder %s329, %s330
      %p341 = scmp.eq.s32.totalorder %s49, 0
      %p342 = por %p340, %p341
      %p343 = scmp.ne.s32.totalorder %s329, %s330
      %p344 = scmp.eq.s32.totalorder %s50, 3
      %p345 = por %p343, %p344
      %p347 = scmp.ne.s32.totalorder %s330, %s346
      %p348 = scmp.eq.s32.totalorder %s50, 0
      %p349 = por %p347, %p348
      %s350 = ssub.s32 %s52, %s59
      %p351 = scmp.eq.s32.totalorder %s350, 0
      %s353 = sadd.s32 %s352, 1
      %s354 = scalar_select %p351, %s352, %s353
      %p357 = pneg %p351
      %p358 = scmp.eq.s32.totalorder %s44, 3
      %p359 = por %p357, %p358
      %p360 = scmp.ne.s32.totalorder %s352, %s355
      %p361 = scmp.eq.s32.totalorder %s44, 0
      %p362 = por %p360, %p361
      %p363 = scmp.ne.s32.totalorder %s352, %s355
      %p364 = scmp.eq.s32.totalorder %s49, 3
      %p365 = por %p363, %p364
      %p366 = scmp.ne.s32.totalorder %s355, %s356
      %p367 = scmp.eq.s32.totalorder %s49, 0
      %p368 = por %p366, %p367
      %p369 = scmp.ne.s32.totalorder %s355, %s356
      %p370 = scmp.eq.s32.totalorder %s50, 3
      %p371 = por %p369, %p370
      %p373 = scmp.ne.s32.totalorder %s356, %s372
      %p374 = scmp.eq.s32.totalorder %s50, 0
      %p375 = por %p373, %p374
      %s376 = ssub.s32 %s52, %s59
      %p377 = scmp.eq.s32.totalorder %s376, 0
      %s379 = sadd.s32 %s378, 1
      %s380 = scalar_select %p377, %s378, %s379
      %p383 = pneg %p377
      %p384 = scmp.eq.s32.totalorder %s44, 3
      %p385 = por %p383, %p384
      %p386 = scmp.ne.s32.totalorder %s378, %s381
      %p387 = scmp.eq.s32.totalorder %s44, 0
      %p388 = por %p386, %p387
      %p389 = scmp.ne.s32.totalorder %s378, %s381
      %p390 = scmp.eq.s32.totalorder %s49, 3
      %p391 = por %p389, %p390
      %p392 = scmp.ne.s32.totalorder %s381, %s382
      %p393 = scmp.eq.s32.totalorder %s49, 0
      %p394 = por %p392, %p393
      %p395 = scmp.ne.s32.totalorder %s381, %s382
      %p396 = scmp.eq.s32.totalorder %s50, 3
      %p397 = por %p395, %p396
      %p399 = scmp.ne.s32.totalorder %s382, %s398
      %p400 = scmp.eq.s32.totalorder %s50, 0
      %p401 = por %p399, %p400
      %s402 = ssub.s32 %s52, %s59
      %p403 = scmp.eq.s32.totalorder %s402, 0
      %s405 = sadd.s32 %s404, 1
      %s406 = scalar_select %p403, %s404, %s405
      %p409 = pneg %p403
      %p410 = scmp.eq.s32.totalorder %s44, 3
      %p411 = por %p409, %p410
      %p412 = scmp.ne.s32.totalorder %s404, %s407
      %p413 = scmp.eq.s32.totalorder %s44, 0
      %p414 = por %p412, %p413
      %p415 = scmp.ne.s32.totalorder %s404, %s407
      %p416 = scmp.eq.s32.totalorder %s49, 3
      %p417 = por %p415, %p416
      %p418 = scmp.ne.s32.totalorder %s407, %s408
      %p419 = scmp.eq.s32.totalorder %s49, 0
      %p420 = por %p418, %p419
      %p421 = scmp.ne.s32.totalorder %s407, %s408
      %p422 = scmp.eq.s32.totalorder %s50, 3
      %p423 = por %p421, %p422
      %p425 = scmp.ne.s32.totalorder %s408, %s424
      %p426 = scmp.eq.s32.totalorder %s50, 0
      %p427 = por %p425, %p426
      %s428 = ssub.s32 %s52, %s59
      %p429 = scmp.eq.s32.totalorder %s428, 0
      %s431 = sadd.s32 %s430, 1
      %s432 = scalar_select %p429, %s430, %s431
      %p435 = pneg %p429
      %p436 = scmp.eq.s32.totalorder %s44, 3
      %p437 = por %p435, %p436
      %p438 = scmp.ne.s32.totalorder %s430, %s433
      %p439 = scmp.eq.s32.totalorder %s44, 0
      %p440 = por %p438, %p439
      %p441 = scmp.ne.s32.totalorder %s430, %s433
      %p442 = scmp.eq.s32.totalorder %s49, 3
      %p443 = por %p441, %p442
      %p444 = scmp.ne.s32.totalorder %s433, %s434
      %p445 = scmp.eq.s32.totalorder %s49, 0
      %p446 = por %p444, %p445
      %p447 = scmp.ne.s32.totalorder %s433, %s434
      %p448 = scmp.eq.s32.totalorder %s50, 3
      %p449 = por %p447, %p448
      %p451 = scmp.ne.s32.totalorder %s434, %s450
      %p452 = scmp.eq.s32.totalorder %s50, 0
      %p453 = por %p451, %p452
      %s454 = ssub.s32 %s52, %s59
      %p455 = scmp.eq.s32.totalorder %s454, 0
      %s457 = sadd.s32 %s456, 1
      %s458 = scalar_select %p455, %s456, %s457
      %p461 = pneg %p455
      %p462 = scmp.eq.s32.totalorder %s44, 3
      %p463 = por %p461, %p462
      %p464 = scmp.ne.s32.totalorder %s456, %s459
      %p465 = scmp.eq.s32.totalorder %s44, 0
      %p466 = por %p464, %p465
      %p467 = scmp.ne.s32.totalorder %s456, %s459
      %p468 = scmp.eq.s32.totalorder %s49, 3
      %p469 = por %p467, %p468
      %p470 = scmp.ne.s32.totalorder %s459, %s460
      %p471 = scmp.eq.s32.totalorder %s49, 0
      %p472 = por %p470, %p471
      %p473 = scmp.ne.s32.totalorder %s459, %s460
      %p474 = scmp.eq.s32.totalorder %s50, 3
      %p475 = por %p473, %p474
      %p477 = scmp.ne.s32.totalorder %s460, %s476
      %p478 = scmp.eq.s32.totalorder %s50, 0
      %p479 = por %p477, %p478
      %s480 = ssub.s32 %s52, %s59
      %p481 = scmp.eq.s32.totalorder %s480, 0
      %s483 = sadd.s32 %s482, 1
      %s484 = scalar_select %p481, %s482, %s483
      %p487 = pneg %p481
      %p488 = scmp.eq.s32.totalorder %s44, 3
      %p489 = por %p487, %p488
      %p490 = scmp.ne.s32.totalorder %s482, %s485
      %p491 = scmp.eq.s32.totalorder %s44, 0
      %p492 = por %p490, %p491
      %p493 = scmp.ne.s32.totalorder %s482, %s485
      %p494 = scmp.eq.s32.totalorder %s49, 3
      %p495 = por %p493, %p494
      %p496 = scmp.ne.s32.totalorder %s485, %s486
      %p497 = scmp.eq.s32.totalorder %s49, 0
      %p498 = por %p496, %p497
      %p499 = scmp.ne.s32.totalorder %s485, %s486
      %p500 = scmp.eq.s32.totalorder %s50, 3
      %p501 = por %p499, %p500
      %p503 = scmp.ne.s32.totalorder %s486, %s502
      %p504 = scmp.eq.s32.totalorder %s50, 0
      %p505 = por %p503, %p504
      %s506 = ssub.s32 %s51, %s63
      %p507 = scmp.eq.s32.totalorder %s506, 0
      %s509 = sadd.s32 %s508, 1
      %s510 = scalar_select %p507, %s508, %s509
      %p513 = pneg %p507
      %p514 = scmp.eq.s32.totalorder %s44, 3
      %p515 = por %p513, %p514
      %p516 = scmp.ne.s32.totalorder %s508, %s511
      %p517 = scmp.eq.s32.totalorder %s44, 0
      %p518 = por %p516, %p517
      %p519 = scmp.ne.s32.totalorder %s508, %s511
      %p520 = scmp.eq.s32.totalorder %s49, 3
      %p521 = por %p519, %p520
      %p522 = scmp.ne.s32.totalorder %s511, %s512
      %p523 = scmp.eq.s32.totalorder %s49, 0
      %p524 = por %p522, %p523
      %p525 = scmp.ne.s32.totalorder %s511, %s512
      %p526 = scmp.eq.s32.totalorder %s50, 3
      %p527 = por %p525, %p526
      %p529 = scmp.ne.s32.totalorder %s512, %s528
      %p530 = scmp.eq.s32.totalorder %s50, 0
      %p531 = por %p529, %p530
      %p532 = scmp.le.s32.totalorder 1, %s44
      %p533 = scmp.lt.s32.totalorder %s44, 5
      %p534 = pnand %p532, %p533
      %p535 = pneg %p534
      // Predicated region
      $region9: #{tpu_custom_call.1} parent=5 // pred_check
        _
      $region10: #{tpu_custom_call.1} parent=5 // pred_check_branch
        %537 = sbr.rel (%p534) target = $region12
      $region11: #{tpu_custom_call.1} parent=5 // pred_region
        %s538 = ssub.s32 %s44, 1
      $region12: #{tpu_custom_call.1} parent=5 // pred_fallthru
        _
      %p539 = scmp.lt.s32.totalorder %s44, 4
      // Predicated region
      $region13: #{tpu_custom_call.1} parent=5 // pred_check
        %p540 = pneg %p539
      $region14: #{tpu_custom_call.1} parent=5 // pred_check_branch
        %542 = sbr.rel (%p540) target = $region16
      $region15: #{tpu_custom_call.1} parent=5 // pred_region
        // Predicated region
        $region17: #{tpu_custom_call.1} parent=15 // pred_check
          %p543 = pneg %p76
        $region18: #{tpu_custom_call.1} parent=15 // pred_check_branch
          %545 = sbr.rel (%p543) target = $region20
        $region19: #{tpu_custom_call.1} parent=15 // pred_region
          %s546 = sand.u32 %s66, 1
          %s547 = scalar_lea.sflag [#allocation5], %s546
          %s548 = sand.u32 %s66, 1
          %s549 = smul.addr %s548, 16
          %s550 = scalar_lea.vmem [#allocation4], %s549
          %552 = vsyncadd %s547, 0
          %s553 = smul.addr %s51, 2
          %s554 = smul.addr %s553, 8
          %s555 = scalar_lea.hbm %s0, %s554
          %s556 = sshll.u32 %s555, 4
          %s557 = int_to_ptr.hbm [resolvable:$true] %s556
          %s558 = sshll.u32 %s550, 4
          %s559 = int_to_ptr.vmem [resolvable:$true] %s558
          %564 = dma.hbm_to_vmem [thread:$0]  %s557, 256, %s559, %s547, 128, 128, 8
        $region20: #{tpu_custom_call.1} parent=15 // pred_fallthru
          _
        // Predicated region
        $region21: #{tpu_custom_call.1} parent=15 // pred_check
          %p565 = pneg %p102
        $region22: #{tpu_custom_call.1} parent=15 // pred_check_branch
          %567 = sbr.rel (%p565) target = $region24
        $region23: #{tpu_custom_call.1} parent=15 // pred_region
          %s568 = sand.u32 %s44, 1
          %s569 = scalar_lea.sflag [#allocation8], %s568
          %s570 = sand.u32 %s92, 1
          %s571 = smul.addr %s570, 64
          %s572 = scalar_lea.vmem [#allocation7], %s571
          %574 = vsyncadd %s569, 0
          %s575 = smul.addr %s52, 16
          %s576 = smul.addr %s575, 4
          %s577 = scalar_lea.hbm %s1, %s576
          %s578 = sshll.u32 %s577, 4
          %s579 = int_to_ptr.hbm [resolvable:$true] %s578
          %s580 = sshll.u32 %s572, 4
          %s581 = int_to_ptr.vmem [resolvable:$true] %s580
          %586 = dma.hbm_to_vmem [thread:$0]  %s579, 1024, %s581, %s569, 64, 64, 4
        $region24: #{tpu_custom_call.1} parent=15 // pred_fallthru
          _
        // Predicated region
        $region25: #{tpu_custom_call.1} parent=15 // pred_check
          %p587 = pneg %p128
        $region26: #{tpu_custom_call.1} parent=15 // pred_check_branch
          %589 = sbr.rel (%p587) target = $region28
        $region27: #{tpu_custom_call.1} parent=15 // pred_region
          %s590 = sand.u32 %s44, 1
          %s591 = scalar_lea.sflag [#allocation8], %s590
          %s592 = sand.u32 %s118, 1
          %s593 = scalar_lea.vmem [#allocation9], %s592
          %595 = vsyncadd %s591, 0
          %s596 = scalar_lea.hbm %s2, %s52
          %s598 = sshll.u32 %s596, 4
          %s599 = int_to_ptr.hbm [resolvable:$true] %s598
          %s600 = sshll.u32 %s593, 4
          %s601 = int_to_ptr.vmem [resolvable:$true] %s600
          %603 = dma.hbm_to_vmem [thread:$0]  %s599, 16, %s601, %s591
        $region28: #{tpu_custom_call.1} parent=15 // pred_fallthru
          _
        // Predicated region
        $region29: #{tpu_custom_call.1} parent=15 // pred_check
          %p604 = pneg %p154
        $region30: #{tpu_custom_call.1} parent=15 // pred_check_branch
          %606 = sbr.rel (%p604) target = $region32
        $region31: #{tpu_custom_call.1} parent=15 // pred_region
          %s607 = sand.u32 %s44, 1
          %s608 = scalar_lea.sflag [#allocation11], %s607
          %s609 = sand.u32 %s144, 1
          %s610 = smul.addr %s609, 64
          %s611 = scalar_lea.vmem [#allocation10], %s610
          %613 = vsyncadd %s608, 0
          %s614 = smul.addr %s52, 16
          %s615 = smul.addr %s614, 4
          %s616 = scalar_lea.hbm %s3, %s615
          %s617 = sshll.u32 %s616, 4
          %s618 = int_to_ptr.hbm [resolvable:$true] %s617
          %s619 = sshll.u32 %s611, 4
          %s620 = int_to_ptr.vmem [resolvable:$true] %s619
          %625 = dma.hbm_to_vmem [thread:$0]  %s618, 1024, %s620, %s608, 64, 64, 4
        $region32: #{tpu_custom_call.1} parent=15 // pred_fallthru
          _
        // Predicated region
        $region33: #{tpu_custom_call.1} parent=15 // pred_check
          %p626 = pneg %p180
        $region34: #{tpu_custom_call.1} parent=15 // pred_check_branch
          %628 = sbr.rel (%p626) target = $region36
        $region35: #{tpu_custom_call.1} parent=15 // pred_region
          %p629 = scmp.lt.s32.totalorder %s52, 1
          %s630 = scalar_select %p629, %s52, 1
          %s631 = scalar_lea.vmem %s4, %s630
        $region36: #{tpu_custom_call.1} parent=15 // pred_fallthru
          _
        // Predicated region
        $region37: #{tpu_custom_call.1} parent=15 // pred_check
          %p632 = pneg %p206
        $region38: #{tpu_custom_call.1} parent=15 // pred_check_branch
          %634 = sbr.rel (%p632) target = $region40
        $region39: #{tpu_custom_call.1} parent=15 // pred_region
          %s635 = sand.u32 %s44, 1
          %s636 = scalar_lea.sflag [#allocation11], %s635
          %s637 = sand.u32 %s196, 1
          %s638 = smul.addr %s637, 64
          %s639 = scalar_lea.vmem [#allocation12], %s638
          %641 = vsyncadd %s636, 0
          %s642 = smul.addr %s52, 16
          %s643 = smul.addr %s642, 4
          %s644 = scalar_lea.hbm %s5, %s643
          %s645 = sshll.u32 %s644, 4
          %s646 = int_to_ptr.hbm [resolvable:$true] %s645
          %s647 = sshll.u32 %s639, 4
          %s648 = int_to_ptr.vmem [resolvable:$true] %s647
          %653 = dma.hbm_to_vmem [thread:$0]  %s646, 1024, %s648, %s636, 64, 64, 4
        $region40: #{tpu_custom_call.1} parent=15 // pred_fallthru
          _
        // Predicated region
        $region41: #{tpu_custom_call.1} parent=15 // pred_check
          %p654 = pneg %p232
        $region42: #{tpu_custom_call.1} parent=15 // pred_check_branch
          %656 = sbr.rel (%p654) target = $region44
        $region43: #{tpu_custom_call.1} parent=15 // pred_region
          %s657 = sand.u32 %s44, 1
          %s658 = scalar_lea.sflag [#allocation14], %s657
          %s659 = sand.u32 %s222, 1
          %s660 = scalar_lea.vmem [#allocation13], %s659
          %662 = vsyncadd %s658, 0
          %s663 = scalar_lea.hbm %s6, %s52
          %s665 = sshll.u32 %s663, 4
          %s666 = int_to_ptr.hbm [resolvable:$true] %s665
          %s667 = sshll.u32 %s660, 4
          %s668 = int_to_ptr.vmem [resolvable:$true] %s667
          %670 = dma.hbm_to_vmem [thread:$0]  %s666, 16, %s668, %s658
        $region44: #{tpu_custom_call.1} parent=15 // pred_fallthru
          _
        // Predicated region
        $region45: #{tpu_custom_call.1} parent=15 // pred_check
          %p671 = pneg %p258
        $region46: #{tpu_custom_call.1} parent=15 // pred_check_branch
          %673 = sbr.rel (%p671) target = $region48
        $region47: #{tpu_custom_call.1} parent=15 // pred_region
          %s674 = sand.u32 %s44, 1
          %s675 = scalar_lea.sflag [#allocation14], %s674
          %s676 = sand.u32 %s248, 1
          %s677 = smul.addr %s676, 64
          %s678 = scalar_lea.vmem [#allocation15], %s677
          %680 = vsyncadd %s675, 0
          %s681 = smul.addr %s52, 16
          %s682 = smul.addr %s681, 4
          %s683 = scalar_lea.hbm %s7, %s682
          %s684 = sshll.u32 %s683, 4
          %s685 = int_to_ptr.hbm [resolvable:$true] %s684
          %s686 = sshll.u32 %s678, 4
          %s687 = int_to_ptr.vmem [resolvable:$true] %s686
          %692 = dma.hbm_to_vmem [thread:$0]  %s685, 1024, %s687, %s675, 64, 64, 4
        $region48: #{tpu_custom_call.1} parent=15 // pred_fallthru
          _
        // Predicated region
        $region49: #{tpu_custom_call.1} parent=15 // pred_check
          %p693 = pneg %p284
        $region50: #{tpu_custom_call.1} parent=15 // pred_check_branch
          %695 = sbr.rel (%p693) target = $region52
        $region51: #{tpu_custom_call.1} parent=15 // pred_region
          %s696 = sand.u32 %s44, 1
          %s697 = scalar_lea.sflag [#allocation17], %s696
          %s698 = sand.u32 %s274, 1
          %s699 = scalar_lea.vmem [#allocation16], %s698
          %701 = vsyncadd %s697, 0
          %s702 = scalar_lea.hbm %s8, %s52
          %s704 = sshll.u32 %s702, 4
          %s705 = int_to_ptr.hbm [resolvable:$true] %s704
          %s706 = sshll.u32 %s699, 4
          %s707 = int_to_ptr.vmem [resolvable:$true] %s706
          %709 = dma.hbm_to_vmem [thread:$0]  %s705, 16, %s707, %s697
        $region52: #{tpu_custom_call.1} parent=15 // pred_fallthru
          _
        // Predicated region
        $region53: #{tpu_custom_call.1} parent=15 // pred_check
          %p710 = pneg %p310
        $region54: #{tpu_custom_call.1} parent=15 // pred_check_branch
          %712 = sbr.rel (%p710) target = $region56
        $region55: #{tpu_custom_call.1} parent=15 // pred_region
          %p713 = scmp.lt.s32.totalorder %s52, 1
          %s714 = scalar_select %p713, %s52, 1
          %s715 = scalar_lea.vmem %s9, %s714
        $region56: #{tpu_custom_call.1} parent=15 // pred_fallthru
          _
        // Predicated region
        $region57: #{tpu_custom_call.1} parent=15 // pred_check
          %p716 = pneg %p336
        $region58: #{tpu_custom_call.1} parent=15 // pred_check_branch
          %718 = sbr.rel (%p716) target = $region60
        $region59: #{tpu_custom_call.1} parent=15 // pred_region
          %s719 = sand.u32 %s44, 1
          %s720 = scalar_lea.sflag [#allocation17], %s719
          %s721 = sand.u32 %s326, 1
          %s722 = scalar_lea.vmem [#allocation18], %s721
          %724 = vsyncadd %s720, 0
          %s725 = scalar_lea.hbm %s10, %s52
          %s727 = sshll.u32 %s725, 4
          %s728 = int_to_ptr.hbm [resolvable:$true] %s727
          %s729 = sshll.u32 %s722, 4
          %s730 = int_to_ptr.vmem [resolvable:$true] %s729
          %732 = dma.hbm_to_vmem [thread:$0]  %s728, 16, %s730, %s720
        $region60: #{tpu_custom_call.1} parent=15 // pred_fallthru
          _
        // Predicated region
        $region61: #{tpu_custom_call.1} parent=15 // pred_check
          %p733 = pneg %p362
        $region62: #{tpu_custom_call.1} parent=15 // pred_check_branch
          %735 = sbr.rel (%p733) target = $region64
        $region63: #{tpu_custom_call.1} parent=15 // pred_region
          %s736 = sand.u32 %s44, 1
          %s737 = scalar_lea.sflag [#allocation20], %s736
          %s738 = sand.u32 %s352, 1
          %s739 = smul.addr %s738, 128
          %s740 = scalar_lea.vmem [#allocation19], %s739
          %742 = vsyncadd %s737, 0
          %s743 = smul.addr %s52, 32
          %s744 = smul.addr %s743, 4
          %s745 = scalar_lea.hbm %s11, %s744
          %s746 = sshll.u32 %s745, 4
          %s747 = int_to_ptr.hbm [resolvable:$true] %s746
          %s748 = sshll.u32 %s740, 4
          %s749 = int_to_ptr.vmem [resolvable:$true] %s748
          %754 = dma.hbm_to_vmem [thread:$0]  %s747, 2048, %s749, %s737, 128, 128, 8
        $region64: #{tpu_custom_call.1} parent=15 // pred_fallthru
          _
        // Predicated region
        $region65: #{tpu_custom_call.1} parent=15 // pred_check
          %p755 = pneg %p388
        $region66: #{tpu_custom_call.1} parent=15 // pred_check_branch
          %757 = sbr.rel (%p755) target = $region68
        $region67: #{tpu_custom_call.1} parent=15 // pred_region
          %p758 = scmp.lt.s32.totalorder %s52, 1
          %s759 = scalar_select %p758, %s52, 1
          %s760 = smul.addr %s759, 2
          %s761 = scalar_lea.vmem %s12, %s760
        $region68: #{tpu_custom_call.1} parent=15 // pred_fallthru
          _
        // Predicated region
        $region69: #{tpu_custom_call.1} parent=15 // pred_check
          %p762 = pneg %p414
        $region70: #{tpu_custom_call.1} parent=15 // pred_check_branch
          %764 = sbr.rel (%p762) target = $region72
        $region71: #{tpu_custom_call.1} parent=15 // pred_region
          %s765 = sand.u32 %s44, 1
          %s766 = scalar_lea.sflag [#allocation20], %s765
          %s767 = sand.u32 %s404, 1
          %s768 = smul.addr %s767, 128
          %s769 = scalar_lea.vmem [#allocation21], %s768
          %771 = vsyncadd %s766, 0
          %s772 = smul.addr %s52, 32
          %s773 = smul.addr %s772, 4
          %s774 = scalar_lea.hbm %s13, %s773
          %s775 = sshll.u32 %s774, 4
          %s776 = int_to_ptr.hbm [resolvable:$true] %s775
          %s777 = sshll.u32 %s769, 4
          %s778 = int_to_ptr.vmem [resolvable:$true] %s777
          %783 = dma.hbm_to_vmem [thread:$0]  %s776, 2048, %s778, %s766, 64, 64, 4
        $region72: #{tpu_custom_call.1} parent=15 // pred_fallthru
          _
        // Predicated region
        $region73: #{tpu_custom_call.1} parent=15 // pred_check
          %p784 = pneg %p440
        $region74: #{tpu_custom_call.1} parent=15 // pred_check_branch
          %786 = sbr.rel (%p784) target = $region76
        $region75: #{tpu_custom_call.1} parent=15 // pred_region
          %p787 = scmp.lt.s32.totalorder %s52, 1
          %s788 = scalar_select %p787, %s52, 1
          %s789 = scalar_lea.vmem %s14, %s788
        $region76: #{tpu_custom_call.1} parent=15 // pred_fallthru
          _
        // Predicated region
        $region77: #{tpu_custom_call.1} parent=15 // pred_check
          %p790 = pneg %p466
        $region78: #{tpu_custom_call.1} parent=15 // pred_check_branch
          %792 = sbr.rel (%p790) target = $region80
        $region79: #{tpu_custom_call.1} parent=15 // pred_region
          %p793 = scmp.lt.s32.totalorder %s52, 1
          %s794 = scalar_select %p793, %s52, 1
          %s795 = scalar_lea.vmem %s15, %s794
        $region80: #{tpu_custom_call.1} parent=15 // pred_fallthru
          _
        // Predicated region
        $region81: #{tpu_custom_call.1} parent=15 // pred_check
          %p796 = pneg %p492
        $region82: #{tpu_custom_call.1} parent=15 // pred_check_branch
          %798 = sbr.rel (%p796) target = $region84
        $region83: #{tpu_custom_call.1} parent=15 // pred_region
          %p799 = scmp.lt.s32.totalorder %s52, 1
          %s800 = scalar_select %p799, %s52, 1
          %s801 = scalar_lea.vmem %s16, %s800
        $region84: #{tpu_custom_call.1} parent=15 // pred_fallthru
          _
      $region16: #{tpu_custom_call.1} parent=5 // pred_fallthru
        _
      %p802 = scmp.le.s32.totalorder 1, %s44
      %p803 = scmp.lt.s32.totalorder %s44, 5
      %p804 = pnand %p802, %p803
      %p805 = pneg %p804
      // Predicated region
      $region85: #{tpu_custom_call.1} parent=5 // pred_check
        _
      $region86: #{tpu_custom_call.1} parent=5 // pred_check_branch
        %807 = sbr.rel (%p804) target = $region88
      $region87: #{tpu_custom_call.1} parent=5 // pred_region
        %s808 = ssub.s32 %s44, 1
        %s809 = sand.u32 %s69, 1
        %s810 = scalar_lea.sflag [#allocation5], %s809
        %s811 = sand.u32 %s69, 1
        %s812 = smul.addr %s811, 16
        %s813 = scalar_lea.vmem [#allocation4], %s812
        // Predicated region
        $region89: #{tpu_custom_call.1} parent=87 // pred_check
          %p814 = pneg %p82
        $region90: #{tpu_custom_call.1} parent=87 // pred_check_branch
          %816 = sbr.rel (%p814) target = $region92
        $region91: #{tpu_custom_call.1} parent=87 // pred_region
          %818 = dma.done %s810, 256
        $region92: #{tpu_custom_call.1} parent=87 // pred_fallthru
          _
        %s819 = sand.u32 %s49, 1
        %s820 = scalar_lea.sflag [#allocation8], %s819
        %s821 = sand.u32 %s95, 1
        %s822 = smul.addr %s821, 64
        %s823 = scalar_lea.vmem [#allocation7], %s822
        // Predicated region
        $region93: #{tpu_custom_call.1} parent=87 // pred_check
          %p824 = pneg %p108
        $region94: #{tpu_custom_call.1} parent=87 // pred_check_branch
          %826 = sbr.rel (%p824) target = $region96
        $region95: #{tpu_custom_call.1} parent=87 // pred_region
          %828 = dma.done %s820, 1024
        $region96: #{tpu_custom_call.1} parent=87 // pred_fallthru
          _
        %s829 = sand.u32 %s49, 1
        %s830 = scalar_lea.sflag [#allocation8], %s829
        %s831 = sand.u32 %s121, 1
        %s832 = scalar_lea.vmem [#allocation9], %s831
        // Predicated region
        $region97: #{tpu_custom_call.1} parent=87 // pred_check
          %p833 = pneg %p134
        $region98: #{tpu_custom_call.1} parent=87 // pred_check_branch
          %835 = sbr.rel (%p833) target = $region100
        $region99: #{tpu_custom_call.1} parent=87 // pred_region
          %837 = dma.done %s830, 16
        $region100: #{tpu_custom_call.1} parent=87 // pred_fallthru
          _
        %s838 = sand.u32 %s49, 1
        %s839 = scalar_lea.sflag [#allocation11], %s838
        %s840 = sand.u32 %s147, 1
        %s841 = smul.addr %s840, 64
        %s842 = scalar_lea.vmem [#allocation10], %s841
        // Predicated region
        $region101: #{tpu_custom_call.1} parent=87 // pred_check
          %p843 = pneg %p160
        $region102: #{tpu_custom_call.1} parent=87 // pred_check_branch
          %845 = sbr.rel (%p843) target = $region104
        $region103: #{tpu_custom_call.1} parent=87 // pred_region
          %847 = dma.done %s839, 1024
        $region104: #{tpu_custom_call.1} parent=87 // pred_fallthru
          _
        %s848 = sand.u32 %s49, 1
        %s849 = scalar_lea.sflag [#allocation11], %s848
        %s850 = sand.u32 %s199, 1
        %s851 = smul.addr %s850, 64
        %s852 = scalar_lea.vmem [#allocation12], %s851
        // Predicated region
        $region105: #{tpu_custom_call.1} parent=87 // pred_check
          %p853 = pneg %p212
        $region106: #{tpu_custom_call.1} parent=87 // pred_check_branch
          %855 = sbr.rel (%p853) target = $region108
        $region107: #{tpu_custom_call.1} parent=87 // pred_region
          %857 = dma.done %s849, 1024
        $region108: #{tpu_custom_call.1} parent=87 // pred_fallthru
          _
        %s858 = sand.u32 %s49, 1
        %s859 = scalar_lea.sflag [#allocation14], %s858
        %s860 = sand.u32 %s225, 1
        %s861 = scalar_lea.vmem [#allocation13], %s860
        // Predicated region
        $region109: #{tpu_custom_call.1} parent=87 // pred_check
          %p862 = pneg %p238
        $region110: #{tpu_custom_call.1} parent=87 // pred_check_branch
          %864 = sbr.rel (%p862) target = $region112
        $region111: #{tpu_custom_call.1} parent=87 // pred_region
          %866 = dma.done %s859, 16
        $region112: #{tpu_custom_call.1} parent=87 // pred_fallthru
          _
        %s867 = sand.u32 %s49, 1
        %s868 = scalar_lea.sflag [#allocation14], %s867
        %s869 = sand.u32 %s251, 1
        %s870 = smul.addr %s869, 64
        %s871 = scalar_lea.vmem [#allocation15], %s870
        // Predicated region
        $region113: #{tpu_custom_call.1} parent=87 // pred_check
          %p872 = pneg %p264
        $region114: #{tpu_custom_call.1} parent=87 // pred_check_branch
          %874 = sbr.rel (%p872) target = $region116
        $region115: #{tpu_custom_call.1} parent=87 // pred_region
          %876 = dma.done %s868, 1024
        $region116: #{tpu_custom_call.1} parent=87 // pred_fallthru
          _
        %s877 = sand.u32 %s49, 1
        %s878 = scalar_lea.sflag [#allocation17], %s877
        %s879 = sand.u32 %s277, 1
        %s880 = scalar_lea.vmem [#allocation16], %s879
        // Predicated region
        $region117: #{tpu_custom_call.1} parent=87 // pred_check
          %p881 = pneg %p290
        $region118: #{tpu_custom_call.1} parent=87 // pred_check_branch
          %883 = sbr.rel (%p881) target = $region120
        $region119: #{tpu_custom_call.1} parent=87 // pred_region
          %885 = dma.done %s878, 16
        $region120: #{tpu_custom_call.1} parent=87 // pred_fallthru
          _
        %s886 = sand.u32 %s49, 1
        %s887 = scalar_lea.sflag [#allocation17], %s886
        %s888 = sand.u32 %s329, 1
        %s889 = scalar_lea.vmem [#allocation18], %s888
        // Predicated region
        $region121: #{tpu_custom_call.1} parent=87 // pred_check
          %p890 = pneg %p342
        $region122: #{tpu_custom_call.1} parent=87 // pred_check_branch
          %892 = sbr.rel (%p890) target = $region124
        $region123: #{tpu_custom_call.1} parent=87 // pred_region
          %894 = dma.done %s887, 16
        $region124: #{tpu_custom_call.1} parent=87 // pred_fallthru
          _
        %s895 = sand.u32 %s49, 1
        %s896 = scalar_lea.sflag [#allocation20], %s895
        %s897 = sand.u32 %s355, 1
        %s898 = smul.addr %s897, 128
        %s899 = scalar_lea.vmem [#allocation19], %s898
        // Predicated region
        $region125: #{tpu_custom_call.1} parent=87 // pred_check
          %p900 = pneg %p368
        $region126: #{tpu_custom_call.1} parent=87 // pred_check_branch
          %902 = sbr.rel (%p900) target = $region128
        $region127: #{tpu_custom_call.1} parent=87 // pred_region
          %904 = dma.done %s896, 2048
        $region128: #{tpu_custom_call.1} parent=87 // pred_fallthru
          _
        %s905 = sand.u32 %s49, 1
        %s906 = scalar_lea.sflag [#allocation20], %s905
        %s907 = sand.u32 %s407, 1
        %s908 = smul.addr %s907, 128
        %s909 = scalar_lea.vmem [#allocation21], %s908
        // Predicated region
        $region129: #{tpu_custom_call.1} parent=87 // pred_check
          %p910 = pneg %p420
        $region130: #{tpu_custom_call.1} parent=87 // pred_check_branch
          %912 = sbr.rel (%p910) target = $region132
        $region131: #{tpu_custom_call.1} parent=87 // pred_region
          %914 = dma.done %s906, 2048
        $region132: #{tpu_custom_call.1} parent=87 // pred_fallthru
          _
        %s915 = sand.u32 %s69, 1
        %s916 = scalar_lea.sflag [#allocation5], %s915
        %s917 = sand.u32 %s69, 1
        %s918 = smul.addr %s917, 16
        %s919 = scalar_lea.vmem [#allocation4], %s918
        %p920 = pneg %p82
        %p921 = pneg %p79
        %s922 = sand.u32 %s49, 1
        %s923 = scalar_lea.sflag [#allocation8], %s922
        %s924 = sand.u32 %s95, 1
        %s925 = smul.addr %s924, 64
        %s926 = scalar_lea.vmem [#allocation7], %s925
        %p927 = pneg %p108
        %p928 = pneg %p105
        %s929 = sand.u32 %s49, 1
        %s930 = scalar_lea.sflag [#allocation8], %s929
        %s931 = sand.u32 %s121, 1
        %s932 = scalar_lea.vmem [#allocation9], %s931
        %p933 = pneg %p134
        %p934 = pneg %p131
        %s935 = sand.u32 %s49, 1
        %s936 = scalar_lea.sflag [#allocation11], %s935
        %s937 = sand.u32 %s147, 1
        %s938 = smul.addr %s937, 64
        %s939 = scalar_lea.vmem [#allocation10], %s938
        %p940 = pneg %p160
        %p941 = pneg %p157
        %p942 = scmp.lt.s32.totalorder %s54, 1
        %s943 = scalar_select %p942, %s54, 1
        %s944 = scalar_lea.vmem %s4, %s943
        %p945 = pneg %p186
        %p946 = pneg %p183
        %s947 = sand.u32 %s49, 1
        %s948 = scalar_lea.sflag [#allocation11], %s947
        %s949 = sand.u32 %s199, 1
        %s950 = smul.addr %s949, 64
        %s951 = scalar_lea.vmem [#allocation12], %s950
        %p952 = pneg %p212
        %p953 = pneg %p209
        %s954 = sand.u32 %s49, 1
        %s955 = scalar_lea.sflag [#allocation14], %s954
        %s956 = sand.u32 %s225, 1
        %s957 = scalar_lea.vmem [#allocation13], %s956
        %p958 = pneg %p238
        %p959 = pneg %p235
        %s960 = sand.u32 %s49, 1
        %s961 = scalar_lea.sflag [#allocation14], %s960
        %s962 = sand.u32 %s251, 1
        %s963 = smul.addr %s962, 64
        %s964 = scalar_lea.vmem [#allocation15], %s963
        %p965 = pneg %p264
        %p966 = pneg %p261
        %s967 = sand.u32 %s49, 1
        %s968 = scalar_lea.sflag [#allocation17], %s967
        %s969 = sand.u32 %s277, 1
        %s970 = scalar_lea.vmem [#allocation16], %s969
        %p971 = pneg %p290
        %p972 = pneg %p287
        %p973 = scmp.lt.s32.totalorder %s54, 1
        %s974 = scalar_select %p973, %s54, 1
        %s975 = scalar_lea.vmem %s9, %s974
        %p976 = pneg %p316
        %p977 = pneg %p313
        %s978 = sand.u32 %s49, 1
        %s979 = scalar_lea.sflag [#allocation17], %s978
        %s980 = sand.u32 %s329, 1
        %s981 = scalar_lea.vmem [#allocation18], %s980
        %p982 = pneg %p342
        %p983 = pneg %p339
        %s984 = sand.u32 %s49, 1
        %s985 = scalar_lea.sflag [#allocation20], %s984
        %s986 = sand.u32 %s355, 1
        %s987 = smul.addr %s986, 128
        %s988 = scalar_lea.vmem [#allocation19], %s987
        %p989 = pneg %p368
        %p990 = pneg %p365
        %p991 = scmp.lt.s32.totalorder %s54, 1
        %s992 = scalar_select %p991, %s54, 1
        %s993 = smul.addr %s992, 2
        %s994 = scalar_lea.vmem %s12, %s993
        %p995 = pneg %p394
        %p996 = pneg %p391
        %s997 = sand.u32 %s49, 1
        %s998 = scalar_lea.sflag [#allocation20], %s997
        %s999 = sand.u32 %s407, 1
        %s1000 = smul.addr %s999, 128
        %s1001 = scalar_lea.vmem [#allocation21], %s1000
        %p1002 = pneg %p420
        %p1003 = pneg %p417
        %p1004 = scmp.lt.s32.totalorder %s54, 1
        %s1005 = scalar_select %p1004, %s54, 1
        %s1006 = scalar_lea.vmem %s14, %s1005
        %p1007 = pneg %p446
        %p1008 = pneg %p443
        %p1009 = scmp.lt.s32.totalorder %s54, 1
        %s1010 = scalar_select %p1009, %s54, 1
        %s1011 = scalar_lea.vmem %s15, %s1010
        %p1012 = pneg %p472
        %p1013 = pneg %p469
        %p1014 = scmp.lt.s32.totalorder %s54, 1
        %s1015 = scalar_select %p1014, %s54, 1
        %s1016 = scalar_lea.vmem %s16, %s1015
        %p1017 = pneg %p498
        %p1018 = pneg %p495
        %p1019 = pneg %p524
        %p1020 = pneg %p521
        %s1021 = sand.u32 %s511, 1
        %s1022 = scalar_lea.sflag [#allocation6], %s1021
        %s1023 = sand.u32 %s511, 1
        %s1024 = smul.addr %s1023, 16
        %s1025 = scalar_lea.vmem [#allocation22], %s1024
        %p1026 = scmp.lt.s32.totalorder %s54, 1
        %s1027 = scalar_select %p1026, %s54, 1
        %s1028 = scalar_lea.vmem %s4, %s1027
        %p1029 = scmp.lt.s32.totalorder %s54, 1
        %s1030 = scalar_select %p1029, %s54, 1
        %s1031 = scalar_lea.vmem %s9, %s1030
        %p1032 = scmp.lt.s32.totalorder %s54, 1
        %s1033 = scalar_select %p1032, %s54, 1
        %s1034 = smul.addr %s1033, 2
        %s1035 = scalar_lea.vmem %s12, %s1034
        %p1036 = scmp.lt.s32.totalorder %s54, 1
        %s1037 = scalar_select %p1036, %s54, 1
        %s1038 = scalar_lea.vmem %s14, %s1037
        %p1039 = scmp.lt.s32.totalorder %s54, 1
        %s1040 = scalar_select %p1039, %s54, 1
        %s1041 = scalar_lea.vmem %s15, %s1040
        %p1042 = scmp.lt.s32.totalorder %s54, 1
        %s1043 = scalar_select %p1042, %s54, 1
        %s1044 = scalar_lea.vmem %s16, %s1043
        %p1046 = scmp.eq.s32.totalorder %s54, 0
        // Predicated region
        $region133: #{tpu_custom_call.1} parent=87 // pred_check
          %p1047 = pneg %p1046
        $region134: #{tpu_custom_call.1} parent=87 // pred_check_branch
          %1049 = sbr.rel (%p1047) target = $region136
        $region135: #{tpu_custom_call.1} parent=87 // pred_region
          %v1050 = vld [vmem:[%s813] sm:$0xff]
          %v1051 = vld [vmem:[%s813 + $0x8] sm:$0xff]
          %1052 = vst [vmem:[#allocation2] sm:$0xff] %v1050
          %1053 = vst [vmem:[#allocation2 + $0x8] sm:$0xff] %v1051
        $region136: #{tpu_custom_call.1} parent=87 // pred_fallthru
          _
        %v1054 = vld [vmem:[#allocation2] sm:$0xff]
        %v1055 = vld [vmem:[#allocation2 + $0x8] sm:$0xff]
        %v1056 = vld [vmem:[%s1031] sm:$0x1]
        %v1057 = vld [vmem:[%s889] sm:$0x1]
        %1058 = vadd.xlane.f32.xlu0 %v1054
        %v1059 = vpop.xlane.xlu0 %1058
        %1060 = vadd.xlane.f32.xlu0 %v1055
        %v1061 = vpop.xlane.xlu0 %1060
        %v1062 = vrcp.pop 128.0
        %v1063 = vmul.f32 128.0, %v1062
        %v1064 = vsub.f32 1.0, %v1063
        %v1065 = vmul.f32 %v1062, %v1064
        %v1066 = vadd.f32 %v1062, %v1065
        %vm1067 = vweird.f32 %v1062
        %v1068 = vsel %vm1067, %v1062, %v1066
        %v1069 = vmul.f32 %v1059, %v1068
        %v1070 = vmul.f32 %v1061, %v1068
        %v1071 = vsub.f32 %v1054, %v1069
        %v1072 = vsub.f32 %v1055, %v1070
        %v1073 = vmul.f32 %v1071, %v1071
        %v1074 = vmul.f32 %v1072, %v1072
        %1075 = vadd.xlane.f32.xlu0 %v1073
        %v1076 = vpop.xlane.xlu0 %1075
        %1077 = vadd.xlane.f32.xlu0 %v1074
        %v1078 = vpop.xlane.xlu0 %1077
        %v1079 = vmul.f32 %v1076, %v1068
        %v1080 = vmul.f32 %v1078, %v1068
        %v1081 = vadd.f32 %v1079, 1e-06
        %v1082 = vadd.f32 %v1080, 1e-06
        %v1083 = vrsqrt.pop %v1081
        %v1084 = vmul.f32 %v1083, %v1081
        %v1085 = vmul.f32 %v1084, %v1083
        %v1086 = vmul.f32 0.5, %v1085
        %v1087 = vsub.f32 1.5, %v1086
        %v1088 = vmul.f32 %v1083, %v1087
        %vm1089 = vweird.f32 %v1081
        %vm1090 = vweird.f32 %v1083
        %vm1091 = vmor %vm1089, %vm1090
        %v1092 = vsel %vm1091, %v1083, %v1088
        %v1093 = vrsqrt.pop %v1082
        %v1094 = vmul.f32 %v1093, %v1082
        %v1095 = vmul.f32 %v1094, %v1093
        %v1096 = vmul.f32 0.5, %v1095
        %v1097 = vsub.f32 1.5, %v1096
        %v1098 = vmul.f32 %v1093, %v1097
        %vm1099 = vweird.f32 %v1082
        %vm1100 = vweird.f32 %v1093
        %vm1101 = vmor %vm1099, %vm1100
        %v1102 = vsel %vm1101, %v1093, %v1098
        %v1103 = vmul.f32 %v1071, %v1092
        %v1104 = vmul.f32 %v1072, %v1102
        %v1106 = vperm.slane %v1056, 0
        %v1108 = vmul.f32 %v1103, %v1106
        %v1109 = vmul.f32 %v1104, %v1106
        %v1111 = vperm.slane %v1057, 0
        %v1113 = vadd.f32 %v1108, %v1111
        %v1114 = vadd.f32 %v1109, %v1111
        %p1115 = scmp.gt.s32.totalorder %s54, 0
        %s1116 = scalar_select %p1115, 1, 0
        %s1117 = scvt.s32.f32 %s1116
        %v1118 = vsub.f32 %v1113, %v1054
        %v1119 = vsub.f32 %v1114, %v1055
        %v1120 = vstv %s1117
        %v1121 = vmul.f32 %v1120, %v1118
        %v1122 = vmul.f32 %v1120, %v1119
        %v1123 = vadd.f32 %v1054, %v1121
        %v1124 = vadd.f32 %v1055, %v1122
        %v1125 = vpack.c.bf16 %v1124, %v1123
        %v1126 = vld [vmem:[%s823] sm:$0xf]
        %v1127 = vld [vmem:[%s823 + $0x4] sm:$0xf]
        %v1128 = vld [vmem:[%s823 + $0x8] sm:$0xf]
        %v1129 = vld [vmem:[%s823 + $0xc] sm:$0xf]
        %v1130 = vld [vmem:[%s823 + $0x10] sm:$0xf]
        %v1131 = vld [vmem:[%s823 + $0x14] sm:$0xf]
        %v1132 = vld [vmem:[%s823 + $0x18] sm:$0xf]
        %v1133 = vld [vmem:[%s823 + $0x1c] sm:$0xf]
        %v1134 = vld [vmem:[%s823 + $0x20] sm:$0xf]
        %v1135 = vld [vmem:[%s823 + $0x24] sm:$0xf]
        %v1136 = vld [vmem:[%s823 + $0x28] sm:$0xf]
        %v1137 = vld [vmem:[%s823 + $0x2c] sm:$0xf]
        %v1138 = vld [vmem:[%s823 + $0x30] sm:$0xf]
        %v1139 = vld [vmem:[%s823 + $0x34] sm:$0xf]
        %v1140 = vld [vmem:[%s823 + $0x38] sm:$0xf]
        %v1141 = vld [vmem:[%s823 + $0x3c] sm:$0xf]
        %v1142 = vld [vmem:[%s832] sm:$0x1]
        %v1144 = vperm.slane %v1142, 0
        %v1162 = vunpack.c.l.b16 %v1126
        %v1163 = vunpack.c.l.b16 %v1127
        %v1164 = vunpack.c.l.b16 %v1128
        %v1165 = vunpack.c.l.b16 %v1129
        %v1166 = vunpack.c.l.b16 %v1130
        %v1167 = vunpack.c.l.b16 %v1131
        %v1168 = vunpack.c.l.b16 %v1132
        %v1169 = vunpack.c.l.b16 %v1133
        %v1170 = vunpack.c.l.b16 %v1134
        %v1171 = vunpack.c.l.b16 %v1135
        %v1172 = vunpack.c.l.b16 %v1136
        %v1173 = vunpack.c.l.b16 %v1137
        %v1174 = vunpack.c.l.b16 %v1138
        %v1175 = vunpack.c.l.b16 %v1139
        %v1176 = vunpack.c.l.b16 %v1140
        %v1177 = vunpack.c.l.b16 %v1141
        %v1178 = vpack.c.b16 %v1163, %v1162
        %v1179 = vpack.c.b16 %v1165, %v1164
        %v1180 = vpack.c.b16 %v1167, %v1166
        %v1181 = vpack.c.b16 %v1169, %v1168
        %v1182 = vpack.c.b16 %v1171, %v1170
        %v1183 = vpack.c.b16 %v1173, %v1172
        %v1184 = vpack.c.b16 %v1175, %v1174
        %v1185 = vpack.c.b16 %v1177, %v1176
        %1194 = vmatpush.bf16.msra.mxu0 %v1185
        %1195 = vmatpush.bf16.msra.mxu0 %v1184
        %1196 = vmatpush.bf16.msra.mxu0 %v1183
        %1197 = vmatpush.bf16.msra.mxu0 %v1182
        %1198 = vmatpush.bf16.msra.mxu0 %v1181
        %1199 = vmatpush.bf16.msra.mxu0 %v1180
        %1200 = vmatpush.bf16.msra.mxu0 %v1179
        %1201 = vmatpush.bf16.msra.mxu0 %v1178
        %1202 = vmatmul.bf16.gmra.mxu0 %v1125
        %v1203 = vpop.f32.mrf.mxu0
        %v1204 = vadd.f32 %v1144, %v1203
        %v1205 = vpop.f32.mrf.mxu0
        %v1206 = vadd.f32 %v1144, %v1205
        %1207 = vdwg.mxu0
        %v1208 = vld [vmem:[%s842] sm:$0xf]
        %v1209 = vld [vmem:[%s842 + $0x4] sm:$0xf]
        %v1210 = vld [vmem:[%s842 + $0x8] sm:$0xf]
        %v1211 = vld [vmem:[%s842 + $0xc] sm:$0xf]
        %v1212 = vld [vmem:[%s842 + $0x10] sm:$0xf]
        %v1213 = vld [vmem:[%s842 + $0x14] sm:$0xf]
        %v1214 = vld [vmem:[%s842 + $0x18] sm:$0xf]
        %v1215 = vld [vmem:[%s842 + $0x1c] sm:$0xf]
        %v1216 = vld [vmem:[%s842 + $0x20] sm:$0xf]
        %v1217 = vld [vmem:[%s842 + $0x24] sm:$0xf]
        %v1218 = vld [vmem:[%s842 + $0x28] sm:$0xf]
        %v1219 = vld [vmem:[%s842 + $0x2c] sm:$0xf]
        %v1220 = vld [vmem:[%s842 + $0x30] sm:$0xf]
        %v1221 = vld [vmem:[%s842 + $0x34] sm:$0xf]
        %v1222 = vld [vmem:[%s842 + $0x38] sm:$0xf]
        %v1223 = vld [vmem:[%s842 + $0x3c] sm:$0xf]
        %v1224 = vld [vmem:[%s1028] sm:$0x1]
        %v1226 = vperm.slane %v1224, 0
        %v1244 = vunpack.c.l.b16 %v1208
        %v1245 = vunpack.c.l.b16 %v1209
        %v1246 = vunpack.c.l.b16 %v1210
        %v1247 = vunpack.c.l.b16 %v1211
        %v1248 = vunpack.c.l.b16 %v1212
        %v1249 = vunpack.c.l.b16 %v1213
        %v1250 = vunpack.c.l.b16 %v1214
        %v1251 = vunpack.c.l.b16 %v1215
        %v1252 = vunpack.c.l.b16 %v1216
        %v1253 = vunpack.c.l.b16 %v1217
        %v1254 = vunpack.c.l.b16 %v1218
        %v1255 = vunpack.c.l.b16 %v1219
        %v1256 = vunpack.c.l.b16 %v1220
        %v1257 = vunpack.c.l.b16 %v1221
        %v1258 = vunpack.c.l.b16 %v1222
        %v1259 = vunpack.c.l.b16 %v1223
        %v1260 = vpack.c.b16 %v1245, %v1244
        %v1261 = vpack.c.b16 %v1247, %v1246
        %v1262 = vpack.c.b16 %v1249, %v1248
        %v1263 = vpack.c.b16 %v1251, %v1250
        %v1264 = vpack.c.b16 %v1253, %v1252
        %v1265 = vpack.c.b16 %v1255, %v1254
        %v1266 = vpack.c.b16 %v1257, %v1256
        %v1267 = vpack.c.b16 %v1259, %v1258
        %1276 = vmatpush.bf16.msra.mxu0 %v1267
        %1277 = vmatpush.bf16.msra.mxu0 %v1266
        %1278 = vmatpush.bf16.msra.mxu0 %v1265
        %1279 = vmatpush.bf16.msra.mxu0 %v1264
        %1280 = vmatpush.bf16.msra.mxu0 %v1263
        %1281 = vmatpush.bf16.msra.mxu0 %v1262
        %1282 = vmatpush.bf16.msra.mxu0 %v1261
        %1283 = vmatpush.bf16.msra.mxu0 %v1260
        %1284 = vmatmul.bf16.gmra.mxu0 %v1125
        %v1285 = vpop.f32.mrf.mxu0
        %v1286 = vadd.f32 %v1226, %v1285
        %v1287 = vpop.f32.mrf.mxu0
        %v1288 = vadd.f32 %v1226, %v1287
        %1289 = vdwg.mxu0
        %v1290 = vld [vmem:[%s852] sm:$0xf]
        %v1291 = vld [vmem:[%s852 + $0x4] sm:$0xf]
        %v1292 = vld [vmem:[%s852 + $0x8] sm:$0xf]
        %v1293 = vld [vmem:[%s852 + $0xc] sm:$0xf]
        %v1294 = vld [vmem:[%s852 + $0x10] sm:$0xf]
        %v1295 = vld [vmem:[%s852 + $0x14] sm:$0xf]
        %v1296 = vld [vmem:[%s852 + $0x18] sm:$0xf]
        %v1297 = vld [vmem:[%s852 + $0x1c] sm:$0xf]
        %v1298 = vld [vmem:[%s852 + $0x20] sm:$0xf]
        %v1299 = vld [vmem:[%s852 + $0x24] sm:$0xf]
        %v1300 = vld [vmem:[%s852 + $0x28] sm:$0xf]
        %v1301 = vld [vmem:[%s852 + $0x2c] sm:$0xf]
        %v1302 = vld [vmem:[%s852 + $0x30] sm:$0xf]
        %v1303 = vld [vmem:[%s852 + $0x34] sm:$0xf]
        %v1304 = vld [vmem:[%s852 + $0x38] sm:$0xf]
        %v1305 = vld [vmem:[%s852 + $0x3c] sm:$0xf]
        %v1306 = vld [vmem:[%s861] sm:$0x1]
        %v1308 = vperm.slane %v1306, 0
        %v1326 = vunpack.c.l.b16 %v1290
        %v1327 = vunpack.c.l.b16 %v1291
        %v1328 = vunpack.c.l.b16 %v1292
        %v1329 = vunpack.c.l.b16 %v1293
        %v1330 = vunpack.c.l.b16 %v1294
        %v1331 = vunpack.c.l.b16 %v1295
        %v1332 = vunpack.c.l.b16 %v1296
        %v1333 = vunpack.c.l.b16 %v1297
        %v1334 = vunpack.c.l.b16 %v1298
        %v1335 = vunpack.c.l.b16 %v1299
        %v1336 = vunpack.c.l.b16 %v1300
        %v1337 = vunpack.c.l.b16 %v1301
        %v1338 = vunpack.c.l.b16 %v1302
        %v1339 = vunpack.c.l.b16 %v1303
        %v1340 = vunpack.c.l.b16 %v1304
        %v1341 = vunpack.c.l.b16 %v1305
        %v1342 = vpack.c.b16 %v1327, %v1326
        %v1343 = vpack.c.b16 %v1329, %v1328
        %v1344 = vpack.c.b16 %v1331, %v1330
        %v1345 = vpack.c.b16 %v1333, %v1332
        %v1346 = vpack.c.b16 %v1335, %v1334
        %v1347 = vpack.c.b16 %v1337, %v1336
        %v1348 = vpack.c.b16 %v1339, %v1338
        %v1349 = vpack.c.b16 %v1341, %v1340
        %1358 = vmatpush.bf16.msra.mxu0 %v1349
        %1359 = vmatpush.bf16.msra.mxu0 %v1348
        %1360 = vmatpush.bf16.msra.mxu0 %v1347
        %1361 = vmatpush.bf16.msra.mxu0 %v1346
        %1362 = vmatpush.bf16.msra.mxu0 %v1345
        %1363 = vmatpush.bf16.msra.mxu0 %v1344
        %1364 = vmatpush.bf16.msra.mxu0 %v1343
        %1365 = vmatpush.bf16.msra.mxu0 %v1342
        %1366 = vmatmul.bf16.gmra.mxu0 %v1125
        %v1367 = vpop.f32.mrf.mxu0
        %v1368 = vadd.f32 %v1308, %v1367
        %v1369 = vpop.f32.mrf.mxu0
        %v1370 = vadd.f32 %v1308, %v1369
        %1371 = vdwg.mxu0
        %v1372 = vmul.f32 %v1204, 0.17677669
        %v1373 = vmul.f32 %v1206, 0.17677669
        %v1374 = vpack.c.bf16 %v1372, %v1372
        %v1375 = vpack.c.bf16 %v1373, %v1373
        %v1376 = vpack.c.bf16 %v1286, %v1286
        %v1377 = vpack.c.bf16 %v1288, %v1288
        %v1378 = vpack.c.bf16 %v1368, %v1368
        %v1379 = vpack.c.bf16 %v1370, %v1370
        %v1382 = vunpack.c.l.b16 %v1374
        %v1383 = vunpack.c.l.b16 %v1375
        %v1384 = vpack.c.b16 %v1383, %v1382
        %v1387 = vunpack.c.l.b16 %v1376
        %v1388 = vunpack.c.l.b16 %v1377
        %v1389 = vpack.c.b16 %v1388, %v1387
        %vm1390 = vcmask 261120
        %v1392 = vsel %vm1390, %v1384, 0
        %v1395 = vsel %vm1390, %v1389, 0
        %1397 = vmatpush.bf16.xpose.msra.mxu0 0
        %1398 = vmatpush.bf16.xpose.msra.mxu0 0
        %1399 = vmatpush.bf16.xpose.msra.mxu0 0
        %1400 = vmatpush.bf16.xpose.msra.mxu0 0
        %1401 = vmatpush.bf16.xpose.msra.mxu0 0
        %1402 = vmatpush.bf16.xpose.msra.mxu0 0
        %1403 = vmatpush.bf16.xpose.msra.mxu0 0
        %1404 = vmatpush.bf16.xpose.msra.mxu0 %v1395
        %1405 = vmatmul.bf16.gmra.mxu0 %v1392
        %v1406 = vpop.f32.mrf.mxu0
        %v1407 = vadd.f32 0.0, %v1406
        %v1408 = vpop.f32.mrf.mxu0
        %v1409 = vadd.f32 0.0, %v1408
        %1410 = vdwg.mxu0
        %vm1411 = vcmask 130048
        %v1412 = vsel %vm1411, %v1407, -inf
        %1413 = vmax.xlane.f32.xlu0 %v1412
        %v1414 = vpop.xlane.xlu0 %1413
        %v1415 = vsel %vm1411, %v1409, -inf
        %1416 = vmax.xlane.f32.xlu0 %v1415
        %v1417 = vpop.xlane.xlu0 %1416
        %v1418 = vsub.f32 %v1407, %v1414
        %v1419 = vsub.f32 %v1409, %v1417
        %v1420 = vmul.f32 %v1418, 1.442695
        %v1421 = vpow.pop %v1420
        %v1422 = vmul.f32 %v1419, 1.442695
        %v1423 = vpow.pop %v1422
        %v1424 = vsel %vm1411, %v1421, 0.0
        %1425 = vadd.xlane.f32.xlu0 %v1424
        %v1426 = vpop.xlane.xlu0 %1425
        %v1427 = vsel %vm1411, %v1423, 0.0
        %1428 = vadd.xlane.f32.xlu0 %v1427
        %v1429 = vpop.xlane.xlu0 %1428
        %v1430 = vrcp.pop %v1426
        %v1431 = vrcp.pop %v1429
        %v1432 = vmul.f32 %v1421, %v1430
        %v1433 = vmul.f32 %v1423, %v1431
        %v1434 = vpack.c.bf16 %v1432, %v1432
        %v1435 = vpack.c.bf16 %v1433, %v1433
        %v1438 = vunpack.c.l.b16 %v1434
        %v1439 = vunpack.c.l.b16 %v1435
        %v1440 = vpack.c.b16 %v1439, %v1438
        %v1443 = vunpack.c.l.b16 %v1378
        %v1444 = vunpack.c.l.b16 %v1379
        %v1445 = vpack.c.b16 %v1444, %v1443
        %v1448 = vsel %vm1411, %v1440, 0
        %1450 = vmatpush.bf16.msra.mxu0 0
        %1451 = vmatpush.bf16.msra.mxu0 0
        %1452 = vmatpush.bf16.msra.mxu0 0
        %1453 = vmatpush.bf16.msra.mxu0 0
        %1454 = vmatpush.bf16.msra.mxu0 0
        %1455 = vmatpush.bf16.msra.mxu0 0
        %1456 = vmatpush.bf16.msra.mxu0 0
        %1457 = vmatpush.bf16.msra.mxu0 %v1445
        %1458 = vmatmul.bf16.gmra.mxu0 %v1448
        %v1459 = vpop.f32.mrf.mxu0
        %v1460 = vadd.f32 0.0, %v1459
        %v1461 = vpop.f32.mrf.mxu0
        %v1462 = vadd.f32 0.0, %v1461
        %1463 = vdwg.mxu0
        %1464 = vst.msk [vmem:[#allocation3] sm:$0xff] %vm1390, %v1460
        %1465 = vst.msk [vmem:[#allocation3 + $0x8] sm:$0xff] %vm1390, %v1462
        %1466 = vrot.lane.b32.xlu0 %v1384, 96
        %v1467 = vpop.permute.xlu0 %1466
        %1468 = vrot.lane.b32.xlu0 %v1389, 96
        %v1469 = vpop.permute.xlu0 %1468
        %v1471 = vsel %vm1390, %v1467, 0
        %v1474 = vsel %vm1390, %v1469, 0
        %1476 = vmatpush.bf16.xpose.msra.mxu0 0
        %1477 = vmatpush.bf16.xpose.msra.mxu0 0
        %1478 = vmatpush.bf16.xpose.msra.mxu0 0
        %1479 = vmatpush.bf16.xpose.msra.mxu0 0
        %1480 = vmatpush.bf16.xpose.msra.mxu0 0
        %1481 = vmatpush.bf16.xpose.msra.mxu0 0
        %1482 = vmatpush.bf16.xpose.msra.mxu0 0
        %1483 = vmatpush.bf16.xpose.msra.mxu0 %v1474
        %1484 = vmatmul.bf16.gmra.mxu0 %v1471
        %v1485 = vpop.f32.mrf.mxu0
        %v1486 = vadd.f32 0.0, %v1485
        %v1487 = vpop.f32.mrf.mxu0
        %v1488 = vadd.f32 0.0, %v1487
        %1489 = vdwg.mxu0
        %v1490 = vsel %vm1411, %v1486, -inf
        %1491 = vmax.xlane.f32.xlu0 %v1490
        %v1492 = vpop.xlane.xlu0 %1491
        %v1493 = vsel %vm1411, %v1488, -inf
        %1494 = vmax.xlane.f32.xlu0 %v1493
        %v1495 = vpop.xlane.xlu0 %1494
        %v1496 = vsub.f32 %v1486, %v1492
        %v1497 = vsub.f32 %v1488, %v1495
        %v1498 = vmul.f32 %v1496, 1.442695
        %v1499 = vpow.pop %v1498
        %v1500 = vmul.f32 %v1497, 1.442695
        %v1501 = vpow.pop %v1500
        %v1502 = vsel %vm1411, %v1499, 0.0
        %1503 = vadd.xlane.f32.xlu0 %v1502
        %v1504 = vpop.xlane.xlu0 %1503
        %v1505 = vsel %vm1411, %v1501, 0.0
        %1506 = vadd.xlane.f32.xlu0 %v1505
        %v1507 = vpop.xlane.xlu0 %1506
        %v1508 = vrcp.pop %v1504
        %v1509 = vrcp.pop %v1507
        %v1510 = vmul.f32 %v1499, %v1508
        %v1511 = vmul.f32 %v1501, %v1509
        %v1512 = vpack.c.bf16 %v1510, %v1510
        %v1513 = vpack.c.bf16 %v1511, %v1511
        %v1516 = vunpack.c.l.b16 %v1512
        %v1517 = vunpack.c.l.b16 %v1513
        %v1518 = vpack.c.b16 %v1517, %v1516
        %1519 = vrot.lane.b32.xlu0 %v1445, 96
        %v1520 = vpop.permute.xlu0 %1519
        %v1523 = vsel %vm1411, %v1518, 0
        %1525 = vmatpush.bf16.msra.mxu0 0
        %1526 = vmatpush.bf16.msra.mxu0 0
        %1527 = vmatpush.bf16.msra.mxu0 0
        %1528 = vmatpush.bf16.msra.mxu0 0
        %1529 = vmatpush.bf16.msra.mxu0 0
        %1530 = vmatpush.bf16.msra.mxu0 0
        %1531 = vmatpush.bf16.msra.mxu0 0
        %1532 = vmatpush.bf16.msra.mxu0 %v1520
        %1533 = vmatmul.bf16.gmra.mxu0 %v1523
        %v1534 = vpop.f32.mrf.mxu0
        %v1535 = vadd.f32 0.0, %v1534
        %v1536 = vpop.f32.mrf.mxu0
        %v1537 = vadd.f32 0.0, %v1536
        %1538 = vdwg.mxu0
        %1541 = vrot.lane.b32.xlu0 %v1535, 32
        %v1542 = vpop.permute.xlu0 %1541
        %1543 = vrot.lane.b32.xlu0 %v1537, 32
        %v1544 = vpop.permute.xlu0 %1543
        %vm1547 = vcmask 523520
        %1548 = vst.msk [vmem:[#allocation3] sm:$0xff] %vm1547, %v1542
        %1549 = vst.msk [vmem:[#allocation3 + $0x8] sm:$0xff] %vm1547, %v1544
        %1550 = vrot.lane.b32.xlu0 %v1384, 64
        %v1551 = vpop.permute.xlu0 %1550
        %1552 = vrot.lane.b32.xlu0 %v1389, 64
        %v1553 = vpop.permute.xlu0 %1552
        %v1555 = vsel %vm1390, %v1551, 0
        %v1558 = vsel %vm1390, %v1553, 0
        %1560 = vmatpush.bf16.xpose.msra.mxu0 0
        %1561 = vmatpush.bf16.xpose.msra.mxu0 0
        %1562 = vmatpush.bf16.xpose.msra.mxu0 0
        %1563 = vmatpush.bf16.xpose.msra.mxu0 0
        %1564 = vmatpush.bf16.xpose.msra.mxu0 0
        %1565 = vmatpush.bf16.xpose.msra.mxu0 0
        %1566 = vmatpush.bf16.xpose.msra.mxu0 0
        %1567 = vmatpush.bf16.xpose.msra.mxu0 %v1558
        %1568 = vmatmul.bf16.gmra.mxu0 %v1555
        %v1569 = vpop.f32.mrf.mxu0
        %v1570 = vadd.f32 0.0, %v1569
        %v1571 = vpop.f32.mrf.mxu0
        %v1572 = vadd.f32 0.0, %v1571
        %1573 = vdwg.mxu0
        %v1574 = vsel %vm1411, %v1570, -inf
        %1575 = vmax.xlane.f32.xlu0 %v1574
        %v1576 = vpop.xlane.xlu0 %1575
        %v1577 = vsel %vm1411, %v1572, -inf
        %1578 = vmax.xlane.f32.xlu0 %v1577
        %v1579 = vpop.xlane.xlu0 %1578
        %v1580 = vsub.f32 %v1570, %v1576
        %v1581 = vsub.f32 %v1572, %v1579
        %v1582 = vmul.f32 %v1580, 1.442695
        %v1583 = vpow.pop %v1582
        %v1584 = vmul.f32 %v1581, 1.442695
        %v1585 = vpow.pop %v1584
        %v1586 = vsel %vm1411, %v1583, 0.0
        %1587 = vadd.xlane.f32.xlu0 %v1586
        %v1588 = vpop.xlane.xlu0 %1587
        %v1589 = vsel %vm1411, %v1585, 0.0
        %1590 = vadd.xlane.f32.xlu0 %v1589
        %v1591 = vpop.xlane.xlu0 %1590
        %v1592 = vrcp.pop %v1588
        %v1593 = vrcp.pop %v1591
        %v1594 = vmul.f32 %v1583, %v1592
        %v1595 = vmul.f32 %v1585, %v1593
        %v1596 = vpack.c.bf16 %v1594, %v1594
        %v1597 = vpack.c.bf16 %v1595, %v1595
        %v1600 = vunpack.c.l.b16 %v1596
        %v1601 = vunpack.c.l.b16 %v1597
        %v1602 = vpack.c.b16 %v1601, %v1600
        %1603 = vrot.lane.b32.xlu0 %v1445, 64
        %v1604 = vpop.permute.xlu0 %1603
        %v1607 = vsel %vm1411, %v1602, 0
        %1609 = vmatpush.bf16.msra.mxu0 0
        %1610 = vmatpush.bf16.msra.mxu0 0
        %1611 = vmatpush.bf16.msra.mxu0 0
        %1612 = vmatpush.bf16.msra.mxu0 0
        %1613 = vmatpush.bf16.msra.mxu0 0
        %1614 = vmatpush.bf16.msra.mxu0 0
        %1615 = vmatpush.bf16.msra.mxu0 0
        %1616 = vmatpush.bf16.msra.mxu0 %v1604
        %1617 = vmatmul.bf16.gmra.mxu0 %v1607
        %v1618 = vpop.f32.mrf.mxu0
        %v1619 = vadd.f32 0.0, %v1618
        %v1620 = vpop.f32.mrf.mxu0
        %v1621 = vadd.f32 0.0, %v1620
        %1622 = vdwg.mxu0
        %1625 = vrot.lane.b32.xlu0 %v1619, 64
        %v1626 = vpop.permute.xlu0 %1625
        %1627 = vrot.lane.b32.xlu0 %v1621, 64
        %v1628 = vpop.permute.xlu0 %1627
        %vm1631 = vcmask 785920
        %1632 = vst.msk [vmem:[#allocation3] sm:$0xff] %vm1631, %v1626
        %1633 = vst.msk [vmem:[#allocation3 + $0x8] sm:$0xff] %vm1631, %v1628
        %1634 = vrot.lane.b32.xlu0 %v1384, 32
        %v1635 = vpop.permute.xlu0 %1634
        %1636 = vrot.lane.b32.xlu0 %v1389, 32
        %v1637 = vpop.permute.xlu0 %1636
        %v1639 = vsel %vm1390, %v1635, 0
        %v1642 = vsel %vm1390, %v1637, 0
        %1644 = vmatpush.bf16.xpose.msra.mxu0 0
        %1645 = vmatpush.bf16.xpose.msra.mxu0 0
        %1646 = vmatpush.bf16.xpose.msra.mxu0 0
        %1647 = vmatpush.bf16.xpose.msra.mxu0 0
        %1648 = vmatpush.bf16.xpose.msra.mxu0 0
        %1649 = vmatpush.bf16.xpose.msra.mxu0 0
        %1650 = vmatpush.bf16.xpose.msra.mxu0 0
        %1651 = vmatpush.bf16.xpose.msra.mxu0 %v1642
        %1652 = vmatmul.bf16.gmra.mxu0 %v1639
        %v1653 = vpop.f32.mrf.mxu0
        %v1654 = vadd.f32 0.0, %v1653
        %v1655 = vpop.f32.mrf.mxu0
        %v1656 = vadd.f32 0.0, %v1655
        %1657 = vdwg.mxu0
        %v1658 = vsel %vm1411, %v1654, -inf
        %1659 = vmax.xlane.f32.xlu0 %v1658
        %v1660 = vpop.xlane.xlu0 %1659
        %v1661 = vsel %vm1411, %v1656, -inf
        %1662 = vmax.xlane.f32.xlu0 %v1661
        %v1663 = vpop.xlane.xlu0 %1662
        %v1664 = vsub.f32 %v1654, %v1660
        %v1665 = vsub.f32 %v1656, %v1663
        %v1666 = vmul.f32 %v1664, 1.442695
        %v1667 = vpow.pop %v1666
        %v1668 = vmul.f32 %v1665, 1.442695
        %v1669 = vpow.pop %v1668
        %v1670 = vsel %vm1411, %v1667, 0.0
        %1671 = vadd.xlane.f32.xlu0 %v1670
        %v1672 = vpop.xlane.xlu0 %1671
        %v1673 = vsel %vm1411, %v1669, 0.0
        %1674 = vadd.xlane.f32.xlu0 %v1673
        %v1675 = vpop.xlane.xlu0 %1674
        %v1676 = vrcp.pop %v1672
        %v1677 = vrcp.pop %v1675
        %v1678 = vmul.f32 %v1667, %v1676
        %v1679 = vmul.f32 %v1669, %v1677
        %v1680 = vpack.c.bf16 %v1678, %v1678
        %v1681 = vpack.c.bf16 %v1679, %v1679
        %v1684 = vunpack.c.l.b16 %v1680
        %v1685 = vunpack.c.l.b16 %v1681
        %v1686 = vpack.c.b16 %v1685, %v1684
        %1687 = vrot.lane.b32.xlu0 %v1445, 32
        %v1688 = vpop.permute.xlu0 %1687
        %v1691 = vsel %vm1411, %v1686, 0
        %1693 = vmatpush.bf16.msra.mxu0 0
        %1694 = vmatpush.bf16.msra.mxu0 0
        %1695 = vmatpush.bf16.msra.mxu0 0
        %1696 = vmatpush.bf16.msra.mxu0 0
        %1697 = vmatpush.bf16.msra.mxu0 0
        %1698 = vmatpush.bf16.msra.mxu0 0
        %1699 = vmatpush.bf16.msra.mxu0 0
        %1700 = vmatpush.bf16.msra.mxu0 %v1688
        %1701 = vmatmul.bf16.gmra.mxu0 %v1691
        %v1702 = vpop.f32.mrf.mxu0
        %v1703 = vadd.f32 0.0, %v1702
        %v1704 = vpop.f32.mrf.mxu0
        %v1705 = vadd.f32 0.0, %v1704
        %1706 = vdwg.mxu0
        %1709 = vrot.lane.b32.xlu0 %v1703, 96
        %v1710 = vpop.permute.xlu0 %1709
        %1711 = vrot.lane.b32.xlu0 %v1705, 96
        %v1712 = vpop.permute.xlu0 %1711
        %vm1715 = vcmask 1048320
        %1716 = vst.msk [vmem:[#allocation3] sm:$0xff] %vm1715, %v1710
        %1717 = vst.msk [vmem:[#allocation3 + $0x8] sm:$0xff] %vm1715, %v1712
        %v1718 = vld [vmem:[#allocation3] sm:$0xff]
        %v1719 = vld [vmem:[#allocation3 + $0x8] sm:$0xff]
        %v1720 = vpack.c.bf16 %v1719, %v1718
        %v1721 = vld [vmem:[%s871] sm:$0xf]
        %v1722 = vld [vmem:[%s871 + $0x4] sm:$0xf]
        %v1723 = vld [vmem:[%s871 + $0x8] sm:$0xf]
        %v1724 = vld [vmem:[%s871 + $0xc] sm:$0xf]
        %v1725 = vld [vmem:[%s871 + $0x10] sm:$0xf]
        %v1726 = vld [vmem:[%s871 + $0x14] sm:$0xf]
        %v1727 = vld [vmem:[%s871 + $0x18] sm:$0xf]
        %v1728 = vld [vmem:[%s871 + $0x1c] sm:$0xf]
        %v1729 = vld [vmem:[%s871 + $0x20] sm:$0xf]
        %v1730 = vld [vmem:[%s871 + $0x24] sm:$0xf]
        %v1731 = vld [vmem:[%s871 + $0x28] sm:$0xf]
        %v1732 = vld [vmem:[%s871 + $0x2c] sm:$0xf]
        %v1733 = vld [vmem:[%s871 + $0x30] sm:$0xf]
        %v1734 = vld [vmem:[%s871 + $0x34] sm:$0xf]
        %v1735 = vld [vmem:[%s871 + $0x38] sm:$0xf]
        %v1736 = vld [vmem:[%s871 + $0x3c] sm:$0xf]
        %v1737 = vld [vmem:[%s880] sm:$0x1]
        %v1739 = vperm.slane %v1737, 0
        %v1757 = vunpack.c.l.b16 %v1721
        %v1758 = vunpack.c.l.b16 %v1722
        %v1759 = vunpack.c.l.b16 %v1723
        %v1760 = vunpack.c.l.b16 %v1724
        %v1761 = vunpack.c.l.b16 %v1725
        %v1762 = vunpack.c.l.b16 %v1726
        %v1763 = vunpack.c.l.b16 %v1727
        %v1764 = vunpack.c.l.b16 %v1728
        %v1765 = vunpack.c.l.b16 %v1729
        %v1766 = vunpack.c.l.b16 %v1730
        %v1767 = vunpack.c.l.b16 %v1731
        %v1768 = vunpack.c.l.b16 %v1732
        %v1769 = vunpack.c.l.b16 %v1733
        %v1770 = vunpack.c.l.b16 %v1734
        %v1771 = vunpack.c.l.b16 %v1735
        %v1772 = vunpack.c.l.b16 %v1736
        %v1773 = vpack.c.b16 %v1758, %v1757
        %v1774 = vpack.c.b16 %v1760, %v1759
        %v1775 = vpack.c.b16 %v1762, %v1761
        %v1776 = vpack.c.b16 %v1764, %v1763
        %v1777 = vpack.c.b16 %v1766, %v1765
        %v1778 = vpack.c.b16 %v1768, %v1767
        %v1779 = vpack.c.b16 %v1770, %v1769
        %v1780 = vpack.c.b16 %v1772, %v1771
        %1789 = vmatpush.bf16.msra.mxu0 %v1780
        %1790 = vmatpush.bf16.msra.mxu0 %v1779
        %1791 = vmatpush.bf16.msra.mxu0 %v1778
        %1792 = vmatpush.bf16.msra.mxu0 %v1777
        %1793 = vmatpush.bf16.msra.mxu0 %v1776
        %1794 = vmatpush.bf16.msra.mxu0 %v1775
        %1795 = vmatpush.bf16.msra.mxu0 %v1774
        %1796 = vmatpush.bf16.msra.mxu0 %v1773
        %1797 = vmatmul.bf16.gmra.mxu0 %v1720
        %v1798 = vpop.f32.mrf.mxu0
        %v1799 = vadd.f32 %v1739, %v1798
        %v1800 = vpop.f32.mrf.mxu0
        %v1801 = vadd.f32 %v1739, %v1800
        %1802 = vdwg.mxu0
        %v1803 = vadd.f32 %v1799, %v1123
        %v1804 = vadd.f32 %v1801, %v1124
        %v1805 = vld [vmem:[%s1041] sm:$0x1]
        %v1806 = vld [vmem:[%s1044] sm:$0x1]
        %1807 = vadd.xlane.f32.xlu0 %v1803
        %v1808 = vpop.xlane.xlu0 %1807
        %1809 = vadd.xlane.f32.xlu0 %v1804
        %v1810 = vpop.xlane.xlu0 %1809
        %v1811 = vmul.f32 %v1808, %v1068
        %v1812 = vmul.f32 %v1810, %v1068
        %v1813 = vsub.f32 %v1803, %v1811
        %v1814 = vsub.f32 %v1804, %v1812
        %v1815 = vmul.f32 %v1813, %v1813
        %v1816 = vmul.f32 %v1814, %v1814
        %1817 = vadd.xlane.f32.xlu0 %v1815
        %v1818 = vpop.xlane.xlu0 %1817
        %1819 = vadd.xlane.f32.xlu0 %v1816
        %v1820 = vpop.xlane.xlu0 %1819
        %v1821 = vmul.f32 %v1818, %v1068
        %v1822 = vmul.f32 %v1820, %v1068
        %v1823 = vadd.f32 %v1821, 1e-06
        %v1824 = vadd.f32 %v1822, 1e-06
        %v1825 = vrsqrt.pop %v1823
        %v1826 = vmul.f32 %v1825, %v1823
        %v1827 = vmul.f32 %v1826, %v1825
        %v1828 = vmul.f32 0.5, %v1827
        %v1829 = vsub.f32 1.5, %v1828
        %v1830 = vmul.f32 %v1825, %v1829
        %vm1831 = vweird.f32 %v1823
        %vm1832 = vweird.f32 %v1825
        %vm1833 = vmor %vm1831, %vm1832
        %v1834 = vsel %vm1833, %v1825, %v1830
        %v1835 = vrsqrt.pop %v1824
        %v1836 = vmul.f32 %v1835, %v1824
        %v1837 = vmul.f32 %v1836, %v1835
        %v1838 = vmul.f32 0.5, %v1837
        %v1839 = vsub.f32 1.5, %v1838
        %v1840 = vmul.f32 %v1835, %v1839
        %vm1841 = vweird.f32 %v1824
        %vm1842 = vweird.f32 %v1835
        %vm1843 = vmor %vm1841, %vm1842
        %v1844 = vsel %vm1843, %v1835, %v1840
        %v1845 = vmul.f32 %v1813, %v1834
        %v1846 = vmul.f32 %v1814, %v1844
        %v1848 = vperm.slane %v1805, 0
        %v1850 = vmul.f32 %v1845, %v1848
        %v1851 = vmul.f32 %v1846, %v1848
        %v1853 = vperm.slane %v1806, 0
        %v1855 = vadd.f32 %v1850, %v1853
        %v1856 = vadd.f32 %v1851, %v1853
        %v1857 = vpack.c.bf16 %v1856, %v1855
        %v1858 = vld [vmem:[%s899] sm:$0xff]
        %v1859 = vld [vmem:[%s899 + $0x8] sm:$0xff]
        %v1860 = vld [vmem:[%s899 + $0x10] sm:$0xff]
        %v1861 = vld [vmem:[%s899 + $0x18] sm:$0xff]
        %v1862 = vld [vmem:[%s899 + $0x20] sm:$0xff]
        %v1863 = vld [vmem:[%s899 + $0x28] sm:$0xff]
        %v1864 = vld [vmem:[%s899 + $0x30] sm:$0xff]
        %v1865 = vld [vmem:[%s899 + $0x38] sm:$0xff]
        %v1866 = vld [vmem:[%s899 + $0x40] sm:$0xff]
        %v1867 = vld [vmem:[%s899 + $0x48] sm:$0xff]
        %v1868 = vld [vmem:[%s899 + $0x50] sm:$0xff]
        %v1869 = vld [vmem:[%s899 + $0x58] sm:$0xff]
        %v1870 = vld [vmem:[%s899 + $0x60] sm:$0xff]
        %v1871 = vld [vmem:[%s899 + $0x68] sm:$0xff]
        %v1872 = vld [vmem:[%s899 + $0x70] sm:$0xff]
        %v1873 = vld [vmem:[%s899 + $0x78] sm:$0xff]
        %v1874 = vld [vmem:[%s1035] sm:$0x3]
        %v1876 = vperm.slane %v1874, 0
        %v1877 = vperm.slane %v1874, 1
        %v1896 = vunpack.c.l.b16 %v1858
        %v1897 = vunpack.c.h.b16 %v1858
        %v1898 = vunpack.c.l.b16 %v1859
        %v1899 = vunpack.c.h.b16 %v1859
        %v1900 = vunpack.c.l.b16 %v1860
        %v1901 = vunpack.c.h.b16 %v1860
        %v1902 = vunpack.c.l.b16 %v1861
        %v1903 = vunpack.c.h.b16 %v1861
        %v1904 = vunpack.c.l.b16 %v1862
        %v1905 = vunpack.c.h.b16 %v1862
        %v1906 = vunpack.c.l.b16 %v1863
        %v1907 = vunpack.c.h.b16 %v1863
        %v1908 = vunpack.c.l.b16 %v1864
        %v1909 = vunpack.c.h.b16 %v1864
        %v1910 = vunpack.c.l.b16 %v1865
        %v1911 = vunpack.c.h.b16 %v1865
        %v1912 = vunpack.c.l.b16 %v1866
        %v1913 = vunpack.c.h.b16 %v1866
        %v1914 = vunpack.c.l.b16 %v1867
        %v1915 = vunpack.c.h.b16 %v1867
        %v1916 = vunpack.c.l.b16 %v1868
        %v1917 = vunpack.c.h.b16 %v1868
        %v1918 = vunpack.c.l.b16 %v1869
        %v1919 = vunpack.c.h.b16 %v1869
        %v1920 = vunpack.c.l.b16 %v1870
        %v1921 = vunpack.c.h.b16 %v1870
        %v1922 = vunpack.c.l.b16 %v1871
        %v1923 = vunpack.c.h.b16 %v1871
        %v1924 = vunpack.c.l.b16 %v1872
        %v1925 = vunpack.c.h.b16 %v1872
        %v1926 = vunpack.c.l.b16 %v1873
        %v1927 = vunpack.c.h.b16 %v1873
        %v1928 = vpack.c.b16 %v1898, %v1896
        %v1929 = vpack.c.b16 %v1899, %v1897
        %v1930 = vpack.c.b16 %v1902, %v1900
        %v1931 = vpack.c.b16 %v1903, %v1901
        %v1932 = vpack.c.b16 %v1906, %v1904
        %v1933 = vpack.c.b16 %v1907, %v1905
        %v1934 = vpack.c.b16 %v1910, %v1908
        %v1935 = vpack.c.b16 %v1911, %v1909
        %v1936 = vpack.c.b16 %v1914, %v1912
        %v1937 = vpack.c.b16 %v1915, %v1913
        %v1938 = vpack.c.b16 %v1918, %v1916
        %v1939 = vpack.c.b16 %v1919, %v1917
        %v1940 = vpack.c.b16 %v1922, %v1920
        %v1941 = vpack.c.b16 %v1923, %v1921
        %v1942 = vpack.c.b16 %v1926, %v1924
        %v1943 = vpack.c.b16 %v1927, %v1925
        %1960 = vmatpush.bf16.msra.mxu0 %v1942
        %1961 = vmatpush.bf16.msra.mxu0 %v1940
        %1962 = vmatpush.bf16.msra.mxu0 %v1938
        %1963 = vmatpush.bf16.msra.mxu0 %v1936
        %1964 = vmatpush.bf16.msra.mxu0 %v1934
        %1965 = vmatpush.bf16.msra.mxu0 %v1932
        %1966 = vmatpush.bf16.msra.mxu0 %v1930
        %1967 = vmatpush.bf16.msra.mxu0 %v1928
        %1968 = vmatmul.bf16.gmra.mxu0 %v1857
        %v1969 = vpop.f32.mrf.mxu0
        %v1970 = vadd.f32 %v1876, %v1969
        %v1971 = vpop.f32.mrf.mxu0
        %v1972 = vadd.f32 %v1876, %v1971
        %1973 = vdwg.mxu0
        %1974 = vmatpush.bf16.msra.mxu0 %v1943
        %1975 = vmatpush.bf16.msra.mxu0 %v1941
        %1976 = vmatpush.bf16.msra.mxu0 %v1939
        %1977 = vmatpush.bf16.msra.mxu0 %v1937
        %1978 = vmatpush.bf16.msra.mxu0 %v1935
        %1979 = vmatpush.bf16.msra.mxu0 %v1933
        %1980 = vmatpush.bf16.msra.mxu0 %v1931
        %1981 = vmatpush.bf16.msra.mxu0 %v1929
        %1982 = vmatmul.bf16.gmra.mxu0 %v1857
        %v1983 = vpop.f32.mrf.mxu0
        %v1984 = vadd.f32 %v1877, %v1983
        %v1985 = vpop.f32.mrf.mxu0
        %v1986 = vadd.f32 %v1877, %v1985
        %1987 = vdwg.mxu0
        %v1988 = vmul.f32 %v1970, 0.5
        %v1989 = vmul.f32 %v1984, 0.5
        %v1990 = vmul.f32 %v1972, 0.5
        %v1991 = vmul.f32 %v1986, 0.5
        %v1992 = vmul.f32 %v1970, 0.044715
        %v1993 = vmul.f32 %v1984, 0.044715
        %v1994 = vmul.f32 %v1972, 0.044715
        %v1995 = vmul.f32 %v1986, 0.044715
        %v1996 = vmul.f32 %v1992, %v1970
        %v1997 = vmul.f32 %v1993, %v1984
        %v1998 = vmul.f32 %v1994, %v1972
        %v1999 = vmul.f32 %v1995, %v1986
        %v2000 = vmul.f32 %v1996, %v1970
        %v2001 = vmul.f32 %v1997, %v1984
        %v2002 = vmul.f32 %v1998, %v1972
        %v2003 = vmul.f32 %v1999, %v1986
        %v2004 = vadd.f32 %v1970, %v2000
        %v2005 = vadd.f32 %v1984, %v2001
        %v2006 = vadd.f32 %v1972, %v2002
        %v2007 = vadd.f32 %v1986, %v2003
        %v2008 = vmul.f32 %v2004, 0.7978846
        %v2009 = vmul.f32 %v2005, 0.7978846
        %v2010 = vmul.f32 %v2006, 0.7978846
        %v2011 = vmul.f32 %v2007, 0.7978846
        %v2012 = vtanh.pop %v2008
        %v2013 = vtanh.pop %v2009
        %v2014 = vtanh.pop %v2010
        %v2015 = vtanh.pop %v2011
        %v2016 = vadd.f32 %v2012, 1.0
        %v2017 = vadd.f32 %v2013, 1.0
        %v2018 = vadd.f32 %v2014, 1.0
        %v2019 = vadd.f32 %v2015, 1.0
        %v2020 = vmul.f32 %v1988, %v2016
        %v2021 = vmul.f32 %v1989, %v2017
        %v2022 = vmul.f32 %v1990, %v2018
        %v2023 = vmul.f32 %v1991, %v2019
        %v2024 = vpack.c.bf16 %v2022, %v2020
        %v2025 = vpack.c.bf16 %v2023, %v2021
        %v2026 = vld [vmem:[%s909] sm:$0xf]
        %v2027 = vld [vmem:[%s909 + $0x4] sm:$0xf]
        %v2028 = vld [vmem:[%s909 + $0x8] sm:$0xf]
        %v2029 = vld [vmem:[%s909 + $0xc] sm:$0xf]
        %v2030 = vld [vmem:[%s909 + $0x10] sm:$0xf]
        %v2031 = vld [vmem:[%s909 + $0x14] sm:$0xf]
        %v2032 = vld [vmem:[%s909 + $0x18] sm:$0xf]
        %v2033 = vld [vmem:[%s909 + $0x1c] sm:$0xf]
        %v2034 = vld [vmem:[%s909 + $0x20] sm:$0xf]
        %v2035 = vld [vmem:[%s909 + $0x24] sm:$0xf]
        %v2036 = vld [vmem:[%s909 + $0x28] sm:$0xf]
        %v2037 = vld [vmem:[%s909 + $0x2c] sm:$0xf]
        %v2038 = vld [vmem:[%s909 + $0x30] sm:$0xf]
        %v2039 = vld [vmem:[%s909 + $0x34] sm:$0xf]
        %v2040 = vld [vmem:[%s909 + $0x38] sm:$0xf]
        %v2041 = vld [vmem:[%s909 + $0x3c] sm:$0xf]
        %v2042 = vld [vmem:[%s909 + $0x40] sm:$0xf]
        %v2043 = vld [vmem:[%s909 + $0x44] sm:$0xf]
        %v2044 = vld [vmem:[%s909 + $0x48] sm:$0xf]
        %v2045 = vld [vmem:[%s909 + $0x4c] sm:$0xf]
        %v2046 = vld [vmem:[%s909 + $0x50] sm:$0xf]
        %v2047 = vld [vmem:[%s909 + $0x54] sm:$0xf]
        %v2048 = vld [vmem:[%s909 + $0x58] sm:$0xf]
        %v2049 = vld [vmem:[%s909 + $0x5c] sm:$0xf]
        %v2050 = vld [vmem:[%s909 + $0x60] sm:$0xf]
        %v2051 = vld [vmem:[%s909 + $0x64] sm:$0xf]
        %v2052 = vld [vmem:[%s909 + $0x68] sm:$0xf]
        %v2053 = vld [vmem:[%s909 + $0x6c] sm:$0xf]
        %v2054 = vld [vmem:[%s909 + $0x70] sm:$0xf]
        %v2055 = vld [vmem:[%s909 + $0x74] sm:$0xf]
        %v2056 = vld [vmem:[%s909 + $0x78] sm:$0xf]
        %v2057 = vld [vmem:[%s909 + $0x7c] sm:$0xf]
        %v2058 = vld [vmem:[%s1038] sm:$0x1]
        %v2060 = vperm.slane %v2058, 0
        %v2094 = vunpack.c.l.b16 %v2026
        %v2095 = vunpack.c.l.b16 %v2027
        %v2096 = vunpack.c.l.b16 %v2028
        %v2097 = vunpack.c.l.b16 %v2029
        %v2098 = vunpack.c.l.b16 %v2030
        %v2099 = vunpack.c.l.b16 %v2031
        %v2100 = vunpack.c.l.b16 %v2032
        %v2101 = vunpack.c.l.b16 %v2033
        %v2102 = vunpack.c.l.b16 %v2034
        %v2103 = vunpack.c.l.b16 %v2035
        %v2104 = vunpack.c.l.b16 %v2036
        %v2105 = vunpack.c.l.b16 %v2037
        %v2106 = vunpack.c.l.b16 %v2038
        %v2107 = vunpack.c.l.b16 %v2039
        %v2108 = vunpack.c.l.b16 %v2040
        %v2109 = vunpack.c.l.b16 %v2041
        %v2110 = vunpack.c.l.b16 %v2042
        %v2111 = vunpack.c.l.b16 %v2043
        %v2112 = vunpack.c.l.b16 %v2044
        %v2113 = vunpack.c.l.b16 %v2045
        %v2114 = vunpack.c.l.b16 %v2046
        %v2115 = vunpack.c.l.b16 %v2047
        %v2116 = vunpack.c.l.b16 %v2048
        %v2117 = vunpack.c.l.b16 %v2049
        %v2118 = vunpack.c.l.b16 %v2050
        %v2119 = vunpack.c.l.b16 %v2051
        %v2120 = vunpack.c.l.b16 %v2052
        %v2121 = vunpack.c.l.b16 %v2053
        %v2122 = vunpack.c.l.b16 %v2054
        %v2123 = vunpack.c.l.b16 %v2055
        %v2124 = vunpack.c.l.b16 %v2056
        %v2125 = vunpack.c.l.b16 %v2057
        %v2126 = vpack.c.b16 %v2095, %v2094
        %v2127 = vpack.c.b16 %v2097, %v2096
        %v2128 = vpack.c.b16 %v2099, %v2098
        %v2129 = vpack.c.b16 %v2101, %v2100
        %v2130 = vpack.c.b16 %v2103, %v2102
        %v2131 = vpack.c.b16 %v2105, %v2104
        %v2132 = vpack.c.b16 %v2107, %v2106
        %v2133 = vpack.c.b16 %v2109, %v2108
        %v2134 = vpack.c.b16 %v2111, %v2110
        %v2135 = vpack.c.b16 %v2113, %v2112
        %v2136 = vpack.c.b16 %v2115, %v2114
        %v2137 = vpack.c.b16 %v2117, %v2116
        %v2138 = vpack.c.b16 %v2119, %v2118
        %v2139 = vpack.c.b16 %v2121, %v2120
        %v2140 = vpack.c.b16 %v2123, %v2122
        %v2141 = vpack.c.b16 %v2125, %v2124
        %2158 = vmatpush.bf16.msra.mxu0 %v2133
        %2159 = vmatpush.bf16.msra.mxu0 %v2132
        %2160 = vmatpush.bf16.msra.mxu0 %v2131
        %2161 = vmatpush.bf16.msra.mxu0 %v2130
        %2162 = vmatpush.bf16.msra.mxu0 %v2129
        %2163 = vmatpush.bf16.msra.mxu0 %v2128
        %2164 = vmatpush.bf16.msra.mxu0 %v2127
        %2165 = vmatpush.bf16.msra.mxu0 %v2126
        %2166 = vmatmul.bf16.gmra.mxu0 %v2024
        %v2167 = vpop.f32.mrf.mxu0
        %v2168 = vadd.f32 %v2060, %v2167
        %v2169 = vpop.f32.mrf.mxu0
        %v2170 = vadd.f32 %v2060, %v2169
        %2171 = vdwg.mxu0
        %2172 = vmatpush.bf16.msra.mxu0 %v2141
        %2173 = vmatpush.bf16.msra.mxu0 %v2140
        %2174 = vmatpush.bf16.msra.mxu0 %v2139
        %2175 = vmatpush.bf16.msra.mxu0 %v2138
        %2176 = vmatpush.bf16.msra.mxu0 %v2137
        %2177 = vmatpush.bf16.msra.mxu0 %v2136
        %2178 = vmatpush.bf16.msra.mxu0 %v2135
        %2179 = vmatpush.bf16.msra.mxu0 %v2134
        %2180 = vmatmul.bf16.gmra.mxu0 %v2025
        %v2181 = vpop.f32.mrf.mxu0
        %v2182 = vadd.f32 %v2168, %v2181
        %v2183 = vpop.f32.mrf.mxu0
        %v2184 = vadd.f32 %v2170, %v2183
        %2185 = vdwg.mxu0
        %v2186 = vadd.f32 %v2182, %v1803
        %v2187 = vadd.f32 %v2184, %v1804
        %2188 = vst [vmem:[#allocation2] sm:$0xff] %v2186
        %2189 = vst [vmem:[#allocation2 + $0x8] sm:$0xff] %v2187
        %p2190 = scmp.eq.s32.totalorder %s54, 1
        // Predicated region
        $region137: #{tpu_custom_call.1} parent=87 // pred_check
          %p2191 = pneg %p2190
        $region138: #{tpu_custom_call.1} parent=87 // pred_check_branch
          %2193 = sbr.rel (%p2191) target = $region140
        $region139: #{tpu_custom_call.1} parent=87 // pred_region
          %2194 = vst [vmem:[%s1025] sm:$0xff] %v2186
          %2195 = vst [vmem:[%s1025 + $0x8] sm:$0xff] %v2187
        $region140: #{tpu_custom_call.1} parent=87 // pred_fallthru
          _
        %s2196 = sand.u32 %s511, 1
        %s2197 = scalar_lea.sflag [#allocation6], %s2196
        %s2198 = sand.u32 %s511, 1
        %s2199 = smul.addr %s2198, 16
        %s2200 = scalar_lea.vmem [#allocation22], %s2199
        // Predicated region
        $region141: #{tpu_custom_call.1} parent=87 // pred_check
          %p2201 = pneg %p521
        $region142: #{tpu_custom_call.1} parent=87 // pred_check_branch
          %2203 = sbr.rel (%p2201) target = $region144
        $region143: #{tpu_custom_call.1} parent=87 // pred_region
          %2205 = vsyncadd %s2197, 0
          %s2206 = smul.addr %s53, 2
          %s2207 = smul.addr %s2206, 8
          %s2208 = scalar_lea.hbm %s17, %s2207
          %s2209 = sshll.u32 %s2200, 4
          %s2210 = int_to_ptr.vmem [resolvable:$true] %s2209
          %s2211 = sshll.u32 %s2208, 4
          %s2212 = int_to_ptr.hbm [resolvable:$true] %s2211
          %2217 = dma.vmem_to_hbm [thread:$0]  %s2210, 256, %s2212, %s2197, 128, 128, 8
        $region144: #{tpu_custom_call.1} parent=87 // pred_fallthru
          _
      $region88: #{tpu_custom_call.1} parent=5 // pred_fallthru
        _
      %p2218 = scmp.le.s32.totalorder 2, %s44
      // Predicated region
      $region145: #{tpu_custom_call.1} parent=5 // pred_check
        %p2219 = pneg %p2218
      $region146: #{tpu_custom_call.1} parent=5 // pred_check_branch
        %2221 = sbr.rel (%p2219) target = $region148
      $region147: #{tpu_custom_call.1} parent=5 // pred_region
        %s2222 = ssub.s32 %s44, 2
        // Predicated region
        $region149: #{tpu_custom_call.1} parent=147 // pred_check
          %p2223 = pneg %p527
        $region150: #{tpu_custom_call.1} parent=147 // pred_check_branch
          %2225 = sbr.rel (%p2223) target = $region152
        $region151: #{tpu_custom_call.1} parent=147 // pred_region
          %s2226 = sand.u32 %s512, 1
          %s2227 = scalar_lea.sflag [#allocation6], %s2226
          %s2228 = sand.u32 %s512, 1
          %s2229 = smul.addr %s2228, 16
          %s2230 = scalar_lea.vmem [#allocation22], %s2229
          %2232 = dma.done %s2227, 256
        $region152: #{tpu_custom_call.1} parent=147 // pred_fallthru
          _
      $region148: #{tpu_custom_call.1} parent=5 // pred_fallthru
        _
    $region6: #{tpu_custom_call.1} parent=1 // loop_footer
      %s48 = sadd.s32 1, %s44
    $region7: #{tpu_custom_call.1} parent=1 // loop_footer_branch
      %43 = sbr.rel target = $region3
    $region8: #{tpu_custom_call.1} parent=1 // loop_exit
      _
    %2233 = vsyncpa [#allocation5], 1
    %s2234 = scalar_lea.sflag [#allocation5], 1
    %2235 = vsyncpa %s2234, 1
    %2236 = vsyncpa [#allocation8], 1
    %s2237 = scalar_lea.sflag [#allocation8], 1
    %2238 = vsyncpa %s2237, 1
    %2239 = vsyncpa [#allocation11], 1
    %s2240 = scalar_lea.sflag [#allocation11], 1
    %2241 = vsyncpa %s2240, 1
    %2242 = vsyncpa [#allocation14], 1
    %s2243 = scalar_lea.sflag [#allocation14], 1
    %2244 = vsyncpa %s2243, 1
    %2245 = vsyncpa [#allocation17], 1
    %s2246 = scalar_lea.sflag [#allocation17], 1
    %2247 = vsyncpa %s2246, 1
    %2248 = vsyncpa [#allocation20], 1
    %s2249 = scalar_lea.sflag [#allocation20], 1
    %2250 = vsyncpa %s2249, 1
    %2251 = vsyncpa [#allocation6], 1
    %s2252 = scalar_lea.sflag [#allocation6], 1
    %2253 = vsyncpa %s2252, 1

</llo_original>
